<compile_context>
chip_gen: v7x
topology: tpu7x:2x2x1
jax: 0.10.0
libtpu: 0.0.40
codegen_flags: <defaults>
</compile_context>

<pallas_src>
import math

import jax
import jax.numpy as jnp
from jax import lax
from jax.experimental import pallas as pl
from jax.experimental.pallas import tpu as pltpu

EPS = 1e-5


# ----------------------------------------------------------------------------
# Pass 1 kernel: fused 3x3 quaternion conv (one bf16 MXU matmul, K = 9*C) +
# per-channel sum / sum-of-squares over the valid (unpadded) positions.
# ----------------------------------------------------------------------------
def make_conv_stats_kernel(C, HpWp, L, q0, Wp):
    offs = [(dy - 1) * Wp + (dx - 1) for dy in range(3) for dx in range(3)]

    def kernel(xp_ref, w_ref, mask_ref, y_ref, stats_ref):
        # xp_ref: (1, C, HpWp) f32 padded-flat activation for image n
        # w_ref : (C, 9*C)     bf16 fused conv weight
        # mask  : (1, L)       f32 {0,1} — 1 at valid (non-pad) band columns
        # y_ref : (1, C, L)    f32 conv output (band layout, lane-dense)
        # stats : (1, C, 2)    f32 per-channel [sum, sumsq] over valid columns

        # 9 shifted taps = contiguous lane slices of the padded flat row.
        taps = [xp_ref[0, :, q0 + o: q0 + o + L] for o in offs]       # 9 x (C, L)
        patches = jnp.concatenate(taps, axis=0).astype(jnp.bfloat16)  # (9C, L)

        # Single fused MXU matmul, f32 accumulation, lane-dense output.
        y = jnp.dot(w_ref[...], patches,
                    preferred_element_type=jnp.float32)               # (C, L)
        y_ref[0] = y

        # Per-channel statistics over valid columns only.
        m = mask_ref[...]                                             # (1, L)
        ym = y * m
        ssum = jnp.sum(ym, axis=1, keepdims=True)                     # (C, 1)
        ssq = jnp.sum(ym * y, axis=1, keepdims=True)                  # (C, 1)
        stats_ref[0] = jnp.concatenate([ssum, ssq], axis=1)           # (C, 2)

    return kernel


def conv_stats_call(xp_flat, w_fused, mask, *, N, C, HpWp, L, q0, Wp):
    kernel = make_conv_stats_kernel(C, HpWp, L, q0, Wp)
    return pl.pallas_call(
        kernel,
        out_shape=(jax.ShapeDtypeStruct((N, C, L), jnp.float32),
                   jax.ShapeDtypeStruct((N, C, 2), jnp.float32)),
        grid=(N,),
        in_specs=[pl.BlockSpec((1, C, HpWp), lambda n: (n, 0, 0)),
                  pl.BlockSpec((C, 9 * C), lambda n: (0, 0)),
                  pl.BlockSpec((1, L), lambda n: (0, 0))],
        out_specs=[pl.BlockSpec((1, C, L), lambda n: (n, 0, 0)),
                   pl.BlockSpec((1, C, 2), lambda n: (n, 0, 0))],
        compiler_params=pltpu.CompilerParams(
            dimension_semantics=("parallel",),
            vmem_limit_bytes=32 * 1024 * 1024),
    )(xp_flat, w_fused, mask)


# ----------------------------------------------------------------------------
# Pass 2 kernel: fused (gamma/inv-denominator/mean/beta) affine + optional
# residual add + relu, vectorized over the whole (C, L) slab.  Output is
# written back in the zero-padded flat layout so it can feed the next conv.
# ----------------------------------------------------------------------------
def make_norm_kernel(C, HpWp, L, q0, with_residual):
    if with_residual:
        def kernel(y_ref, a_ref, b_ref, mask_ref, res_ref, o_ref):
            y = y_ref[0]                                    # (C, L) f32
            out = a_ref[...] * y + b_ref[0]                 # scale/shift (fused)
            out = out + res_ref[0, :, q0:q0 + L]            # residual (band of x)
            out = jnp.maximum(out, 0.0) * mask_ref[...]     # relu, zero the pads
            o_ref[0] = jnp.zeros((C, HpWp), o_ref.dtype)
            o_ref[0, :, q0:q0 + L] = out.astype(o_ref.dtype)
    else:
        def kernel(y_ref, a_ref, b_ref, mask_ref, o_ref):
            y = y_ref[0]
            out = jnp.maximum(a_ref[...] * y + b_ref[0], 0.0) * mask_ref[...]
            o_ref[0] = jnp.zeros((C, HpWp), o_ref.dtype)
            o_ref[0, :, q0:q0 + L] = out.astype(o_ref.dtype)
    return kernel


def norm_call(y_band, a, b, mask, residual, *, N, C, HpWp, L, q0):
    with_res = residual is not None
    kernel = make_norm_kernel(C, HpWp, L, q0, with_res)
    in_specs = [pl.BlockSpec((1, C, L), lambda n: (n, 0, 0)),
                pl.BlockSpec((C, 1), lambda n: (0, 0)),
                pl.BlockSpec((1, C, 1), lambda n: (n, 0, 0)),
                pl.BlockSpec((1, L), lambda n: (0, 0))]
    args = [y_band, a, b, mask]
    if with_res:
        in_specs.append(pl.BlockSpec((1, C, HpWp), lambda n: (n, 0, 0)))
        args.append(residual)
    return pl.pallas_call(
        kernel,
        out_shape=jax.ShapeDtypeStruct((N, C, HpWp), jnp.float32),
        grid=(N,),
        in_specs=in_specs,
        out_specs=pl.BlockSpec((1, C, HpWp), lambda n: (n, 0, 0)),
        compiler_params=pltpu.CompilerParams(
            dimension_semantics=("parallel",),
            vmem_limit_bytes=32 * 1024 * 1024),
    )(*args)


# ----------------------------------------------------------------------------
# Plain-JAX glue (tiny scalars / parameter reshapes only)
# ----------------------------------------------------------------------------
def make_quaternion_conv_weight(key, c_in, c_out, ksize=3):
    """Hamilton-product quaternion conv weight, returned as OIHW (c_out,c_in,k,k)."""
    cqo, cqi = c_out // 4, c_in // 4
    keys = jax.random.split(key, 4)
    scale = 1.0 / math.sqrt(cqi * ksize * ksize)
    r, i, j, k = [
        jax.random.uniform(kk, (cqo, cqi, ksize, ksize), minval=-scale,
                           maxval=scale, dtype=jnp.float32)
        for kk in keys
    ]
    row_r = jnp.concatenate([r, -i, -j, -k], axis=1)
    row_i = jnp.concatenate([i, r, -k, j], axis=1)
    row_j = jnp.concatenate([j, k, r, -i], axis=1)
    row_k = jnp.concatenate([k, -j, i, r], axis=1)
    return jnp.concatenate([row_r, row_i, row_j, row_k], axis=0)


def fuse_weight(w_oihw):
    """OIHW (C_out, C_in, 3, 3) -> (C_out, 9*C_in) bf16, tap-major columns."""
    c_out, c_in = w_oihw.shape[0], w_oihw.shape[1]
    return jnp.transpose(w_oihw, (0, 2, 3, 1)).reshape(
        c_out, 9 * c_in).astype(jnp.bfloat16)


def norm_affine(stats, gamma, beta, *, N, C, Cq, H, W, eps=EPS):
    """Finish the global quaternion-instance-norm stats and fold gamma/beta:
    returns per-channel scale a (C,1) and per-(n,channel) shift b (N,C,1) such
    that normalized = a * y + b."""
    ch_sum = stats[:, :, 0]                                  # (N, C)
    ch_sq = stats[:, :, 1]                                   # (N, C)
    comp_sum = ch_sum.reshape(N, 4, Cq).sum(-1)              # (N, 4)
    comp_sq = ch_sq.reshape(N, 4, Cq).sum(-1)                # (N, 4)
    cnt = Cq * H * W
    mean = comp_sum / cnt                                    # per-(n, component)
    # global quat_variance = mean over (N, Cq, H, W) of sum_c delta_c^2
    var = (comp_sq - comp_sum * mean).sum() / (N * cnt)
    inv = lax.rsqrt(var + eps)                               # EUP-friendly rsqrt
    gamma_ch = jnp.tile(gamma.reshape(Cq), 4)                # (C,)
    beta_ch = beta.reshape(C)                                # (C,)
    a = gamma_ch * inv                                       # (C,)
    mean_ch = jnp.repeat(mean, Cq, axis=1)                   # (N, C)
    b = beta_ch[None, :] - mean_ch * a[None, :]              # (N, C)
    return a.reshape(C, 1).astype(jnp.float32), b.reshape(N, C, 1).astype(jnp.float32)


def residual_block_pallas(x, w1, w2, gamma1, beta1, gamma2, beta2):
    N, C, H, W = x.shape
    Cq = C // 4
    Hp, Wp = H + 2, W + 2
    HpWp = Hp * Wp
    L = (H - 1) * Wp + W      # length of the interior "band"
    q0 = Wp + 1               # flat offset of the first valid padded position

    # zero-padded, spatially-flattened activation (conv padding lives here)
    xp = jnp.pad(x, ((0, 0), (0, 0), (1, 1), (1, 1))).reshape(N, C, HpWp)

    # band validity mask: 1 where the padded column index is in [1, W]
    wq = (q0 + jnp.arange(L)) % Wp
    mask = ((wq >= 1) & (wq <= W)).astype(jnp.float32).reshape(1, L)

    w1f = fuse_weight(w1)
    w2f = fuse_weight(w2)

    dims = dict(N=N, C=C, HpWp=HpWp, L=L, q0=q0)

    # ---- stage 1: relu(norm1(conv1(x)))  (no residual) ----------------------
    y1_band, stats1 = conv_stats_call(xp, w1f, mask, Wp=Wp, **dims)
    a1, b1 = norm_affine(stats1, gamma1, beta1, N=N, C=C, Cq=Cq, H=H, W=W)
    y1_pad = norm_call(y1_band, a1, b1, mask, None, **dims)   # padded-flat, relu'd

    # ---- stage 2: relu(x + norm2(conv2(y1))) --------------------------------
    y2_band, stats2 = conv_stats_call(y1_pad, w2f, mask, Wp=Wp, **dims)
    a2, b2 = norm_affine(stats2, gamma2, beta2, N=N, C=C, Cq=Cq, H=H, W=W)
    out_pad = norm_call(y2_band, a2, b2, mask, xp, **dims)    # residual = x band

    return out_pad.reshape(N, C, Hp, Wp)[:, :, 1:H + 1, 1:W + 1]


# ----------------------------------------------------------------------------
# Pure-JAX reference (correctness check)
# ----------------------------------------------------------------------------
def _quat_instance_norm_ref(y, gamma, beta, eps):
    comps = jnp.split(y, 4, axis=1)
    deltas = [c - jnp.mean(c, axis=(1, 2, 3), keepdims=True) for c in comps]
    var = jnp.mean(sum(d * d for d in deltas))
    denom = jnp.sqrt(var + eps)
    betas = jnp.split(beta, 4, axis=1)
    return jnp.concatenate(
        [gamma * (d / denom) + b for d, b in zip(deltas, betas)], axis=1)


def residual_block_ref(x, w1, w2, gamma1, beta1, gamma2, beta2):
    def conv(z, w):
        return lax.conv_general_dilated(
            z, w, (1, 1), ((1, 1), (1, 1)),
            dimension_numbers=("NCHW", "OIHW", "NCHW"))

    y = jax.nn.relu(_quat_instance_norm_ref(conv(x, w1), gamma1, beta1, EPS))
    y = _quat_instance_norm_ref(conv(y, w2), gamma2, beta2, EPS)
    return jax.nn.relu(x + y)


# ----------------------------------------------------------------------------
if __name__ == "__main__":
    key = jax.random.PRNGKey(0)
    kx, kw1, kw2 = jax.random.split(key, 3)

    N, C, H, W = 2, 8, 16, 16      # channel_num must be divisible by 4
    x = jax.random.normal(kx, (N, C, H, W), dtype=jnp.float32)

    w1 = make_quaternion_conv_weight(kw1, C, C)
    w2 = make_quaternion_conv_weight(kw2, C, C)
    gamma1 = jnp.full((1, C // 4, 1, 1), 1.0, jnp.float32)
    beta1 = jnp.zeros((1, C, 1, 1), jnp.float32)
    gamma2 = jnp.full((1, C // 4, 1, 1), 1.0, jnp.float32)
    beta2 = jnp.zeros((1, C, 1, 1), jnp.float32)

    out = jax.block_until_ready(
        jax.jit(residual_block_pallas)(x, w1, w2, gamma1, beta1, gamma2, beta2))
    ref = residual_block_ref(x, w1, w2, gamma1, beta1, gamma2, beta2)

    assert out.shape == (N, C, H, W), out.shape
    # tolerance loosened vs rev 1 because the MXU operands are bf16 (f32 accum)
    assert jnp.allclose(out, ref, rtol=5e-2, atol=5e-2), float(
        jnp.max(jnp.abs(out - ref)))
    print("KERNEL_OK")
</pallas_src>

<mosaic_0001>
module attributes {stable_mosaic.version = 11 : i64} {
  func.func @kernel(%arg0: i32, %arg1: memref<1x8x324xf32, #tpu.memory_space<vmem>>, %arg2: memref<8x72xbf16, #tpu.memory_space<vmem>>, %arg3: memref<1x286xf32, #tpu.memory_space<vmem>>, %arg4: memref<1x8x286xf32, #tpu.memory_space<vmem>>, %arg5: memref<1x8x2xf32, #tpu.memory_space<vmem>>) attributes {dimension_semantics = [#tpu.dimension_semantics<parallel>], iteration_bounds = array<i64: 2>, scalar_prefetch = 0 : i64, scratch_operands = 0 : i64, tpu.core_type = #tpu.core_type<tc>, window_params = [{transform_indices = @transform_0, window_bounds = array<i64: 1, 8, 324>}, {pipeline_mode = #tpu.pipeline_mode<synchronous>, transform_indices = @transform_1, window_bounds = array<i64: 8, 72>}, {pipeline_mode = #tpu.pipeline_mode<synchronous>, transform_indices = @transform_2, window_bounds = array<i64: 1, 286>}, {transform_indices = @transform_3, window_bounds = array<i64: 1, 8, 286>}, {transform_indices = @transform_4, window_bounds = array<i64: 1, 8, 2>}]} {
    %c0 = arith.constant 0 : index
    %c0_0 = arith.constant 0 : index
    %c0_1 = arith.constant 0 : index
    %0 = vector.load %arg1[%c0, %c0_0, %c0_1] : memref<1x8x324xf32, #tpu.memory_space<vmem>>, vector<1x8x286xf32>
    %1 = vector.shape_cast %0 : vector<1x8x286xf32> to vector<8x286xf32>
    %c0_2 = arith.constant 0 : index
    %c0_3 = arith.constant 0 : index
    %c1 = arith.constant 1 : index
    %2 = vector.load %arg1[%c0_2, %c0_3, %c1] : memref<1x8x324xf32, #tpu.memory_space<vmem>>, vector<1x8x286xf32>
    %3 = vector.shape_cast %2 : vector<1x8x286xf32> to vector<8x286xf32>
    %c0_4 = arith.constant 0 : index
    %c0_5 = arith.constant 0 : index
    %c2 = arith.constant 2 : index
    %4 = vector.load %arg1[%c0_4, %c0_5, %c2] : memref<1x8x324xf32, #tpu.memory_space<vmem>>, vector<1x8x286xf32>
    %5 = vector.shape_cast %4 : vector<1x8x286xf32> to vector<8x286xf32>
    %c0_6 = arith.constant 0 : index
    %c0_7 = arith.constant 0 : index
    %c18 = arith.constant 18 : index
    %6 = vector.load %arg1[%c0_6, %c0_7, %c18] : memref<1x8x324xf32, #tpu.memory_space<vmem>>, vector<1x8x286xf32>
    %7 = vector.shape_cast %6 : vector<1x8x286xf32> to vector<8x286xf32>
    %c0_8 = arith.constant 0 : index
    %c0_9 = arith.constant 0 : index
    %c19 = arith.constant 19 : index
    %8 = vector.load %arg1[%c0_8, %c0_9, %c19] : memref<1x8x324xf32, #tpu.memory_space<vmem>>, vector<1x8x286xf32>
    %9 = vector.shape_cast %8 : vector<1x8x286xf32> to vector<8x286xf32>
    %c0_10 = arith.constant 0 : index
    %c0_11 = arith.constant 0 : index
    %c20 = arith.constant 20 : index
    %10 = vector.load %arg1[%c0_10, %c0_11, %c20] : memref<1x8x324xf32, #tpu.memory_space<vmem>>, vector<1x8x286xf32>
    %11 = vector.shape_cast %10 : vector<1x8x286xf32> to vector<8x286xf32>
    %c0_12 = arith.constant 0 : index
    %c0_13 = arith.constant 0 : index
    %c36 = arith.constant 36 : index
    %12 = vector.load %arg1[%c0_12, %c0_13, %c36] : memref<1x8x324xf32, #tpu.memory_space<vmem>>, vector<1x8x286xf32>
    %13 = vector.shape_cast %12 : vector<1x8x286xf32> to vector<8x286xf32>
    %c0_14 = arith.constant 0 : index
    %c0_15 = arith.constant 0 : index
    %c37 = arith.constant 37 : index
    %14 = vector.load %arg1[%c0_14, %c0_15, %c37] : memref<1x8x324xf32, #tpu.memory_space<vmem>>, vector<1x8x286xf32>
    %15 = vector.shape_cast %14 : vector<1x8x286xf32> to vector<8x286xf32>
    %c0_16 = arith.constant 0 : index
    %c0_17 = arith.constant 0 : index
    %c38 = arith.constant 38 : index
    %16 = vector.load %arg1[%c0_16, %c0_17, %c38] : memref<1x8x324xf32, #tpu.memory_space<vmem>>, vector<1x8x286xf32>
    %17 = vector.shape_cast %16 : vector<1x8x286xf32> to vector<8x286xf32>
    %18 = tpu.concatenate %1, %3, %5, %7, %9, %11, %13, %15, %17 in 0 : vector<8x286xf32>, vector<8x286xf32>, vector<8x286xf32>, vector<8x286xf32>, vector<8x286xf32>, vector<8x286xf32>, vector<8x286xf32>, vector<8x286xf32>, vector<8x286xf32> -> vector<72x286xf32>
    %19 = arith.truncf %18 : vector<72x286xf32> to vector<72x286xbf16>
    %c0_18 = arith.constant 0 : index
    %c0_19 = arith.constant 0 : index
    %20 = vector.load %arg2[%c0_18, %c0_19] : memref<8x72xbf16, #tpu.memory_space<vmem>>, vector<8x72xbf16>
    %cst = arith.constant dense<0.000000e+00> : vector<8x286xf32>
    %21 = tpu.matmul %20, %19, %cst {dimension_numbers = #tpu.dot_dimension_numbers<[1], [0], [0], [1], [0, 0, 1, 1], [], []>} : vector<8x72xbf16>, vector<72x286xbf16>, vector<8x286xf32> -> vector<8x286xf32>
    %c0_20 = arith.constant 0 : index
    %c0_21 = arith.constant 0 : index
    %c0_22 = arith.constant 0 : index
    %22 = vector.load %arg4[%c0_20, %c0_21, %c0_22] : memref<1x8x286xf32, #tpu.memory_space<vmem>>, vector<1x8x286xf32>
    %23 = vector.shape_cast %22 : vector<1x8x286xf32> to vector<8x286xf32>
    %24 = vector.shape_cast %21 : vector<8x286xf32> to vector<1x8x286xf32>
    tpu.vector_store %arg4[%c0_20, %c0_21, %c0_22], %24 {strides = array<i32>} : memref<1x8x286xf32, #tpu.memory_space<vmem>>, vector<1x8x286xf32>,
    %c0_23 = arith.constant 0 : index
    %c0_24 = arith.constant 0 : index
    %25 = vector.load %arg3[%c0_23, %c0_24] : memref<1x286xf32, #tpu.memory_space<vmem>>, vector<1x286xf32>
    %26 = vector.broadcast %25 : vector<1x286xf32> to vector<8x286xf32>
    %27 = arith.mulf %21, %26 : vector<8x286xf32>
    %cst_25 = arith.constant dense<0.000000e+00> : vector<8xf32>
    %28 = vector.multi_reduction <add>, %27, %cst_25 [1] : vector<8x286xf32> to vector<8xf32>
    %29 = vector.shape_cast %28 : vector<8xf32> to vector<8x1xf32>
    %30 = arith.mulf %27, %21 : vector<8x286xf32>
    %cst_26 = arith.constant dense<0.000000e+00> : vector<8xf32>
    %31 = vector.multi_reduction <add>, %30, %cst_26 [1] : vector<8x286xf32> to vector<8xf32>
    %32 = vector.shape_cast %31 : vector<8xf32> to vector<8x1xf32>
    %33 = tpu.concatenate %29, %32 in 1 : vector<8x1xf32>, vector<8x1xf32> -> vector<8x2xf32>
    %c0_27 = arith.constant 0 : index
    %c0_28 = arith.constant 0 : index
    %c0_29 = arith.constant 0 : index
    %34 = vector.load %arg5[%c0_27, %c0_28, %c0_29] : memref<1x8x2xf32, #tpu.memory_space<vmem>>, vector<1x8x2xf32>
    %35 = vector.shape_cast %34 : vector<1x8x2xf32> to vector<8x2xf32>
    %36 = vector.shape_cast %33 : vector<8x2xf32> to vector<1x8x2xf32>
    tpu.vector_store %arg5[%c0_27, %c0_28, %c0_29], %36 {strides = array<i32>} : memref<1x8x2xf32, #tpu.memory_space<vmem>>, vector<1x8x2xf32>,
    return
  }
  func.func @transform_0(%arg0: i32) -> (i32, i32, i32) {
    %c0_i32 = arith.constant 0 : i32
    %c0_i32_0 = arith.constant 0 : i32
    %c0_i32_1 = arith.constant 0 : i32
    return %arg0, %c0_i32, %c0_i32_0 : i32, i32, i32
  }
  func.func @transform_1(%arg0: i32) -> (i32, i32) {
    %c0_i32 = arith.constant 0 : i32
    %c0_i32_0 = arith.constant 0 : i32
    %c0_i32_1 = arith.constant 0 : i32
    return %c0_i32, %c0_i32_0 : i32, i32
  }
  func.func @transform_2(%arg0: i32) -> (i32, i32) {
    %c0_i32 = arith.constant 0 : i32
    %c0_i32_0 = arith.constant 0 : i32
    %c0_i32_1 = arith.constant 0 : i32
    return %c0_i32, %c0_i32_0 : i32, i32
  }
  func.func @transform_3(%arg0: i32) -> (i32, i32, i32) {
    %c0_i32 = arith.constant 0 : i32
    %c0_i32_0 = arith.constant 0 : i32
    %c0_i32_1 = arith.constant 0 : i32
    return %arg0, %c0_i32, %c0_i32_0 : i32, i32, i32
  }
  func.func @transform_4(%arg0: i32) -> (i32, i32, i32) {
    %c0_i32 = arith.constant 0 : i32
    %c0_i32_0 = arith.constant 0 : i32
    %c0_i32_1 = arith.constant 0 : i32
    return %arg0, %c0_i32, %c0_i32_0 : i32, i32, i32
  }
}

module attributes {stable_mosaic.version = 11 : i64} {
  func.func @kernel(%arg0: i32, %arg1: memref<1x8x286xf32, #tpu.memory_space<vmem>>, %arg2: memref<8x1xf32, #tpu.memory_space<vmem>>, %arg3: memref<1x8x1xf32, #tpu.memory_space<vmem>>, %arg4: memref<1x286xf32, #tpu.memory_space<vmem>>, %arg5: memref<1x8x324xf32, #tpu.memory_space<vmem>>, %arg6: memref<1x8x324xf32, #tpu.memory_space<vmem>>) attributes {dimension_semantics = [#tpu.dimension_semantics<parallel>], iteration_bounds = array<i64: 2>, scalar_prefetch = 0 : i64, scratch_operands = 0 : i64, tpu.core_type = #tpu.core_type<tc>, window_params = [{transform_indices = @transform_0, window_bounds = array<i64: 1, 8, 286>}, {pipeline_mode = #tpu.pipeline_mode<synchronous>, transform_indices = @transform_1, window_bounds = array<i64: 8, 1>}, {transform_indices = @transform_2, window_bounds = array<i64: 1, 8, 1>}, {pipeline_mode = #tpu.pipeline_mode<synchronous>, transform_indices = @transform_3, window_bounds = array<i64: 1, 286>}, {transform_indices = @transform_4, window_bounds = array<i64: 1, 8, 324>}, {transform_indices = @transform_5, window_bounds = array<i64: 1, 8, 324>}]} {
    %c0 = arith.constant 0 : index
    %c0_0 = arith.constant 0 : index
    %c0_1 = arith.constant 0 : index
    %0 = vector.load %arg1[%c0, %c0_0, %c0_1] : memref<1x8x286xf32, #tpu.memory_space<vmem>>, vector<1x8x286xf32>
    %1 = vector.shape_cast %0 : vector<1x8x286xf32> to vector<8x286xf32>
    %c0_2 = arith.constant 0 : index
    %c0_3 = arith.constant 0 : index
    %2 = vector.load %arg2[%c0_2, %c0_3] : memref<8x1xf32, #tpu.memory_space<vmem>>, vector<8x1xf32>
    %3 = vector.broadcast %2 : vector<8x1xf32> to vector<8x286xf32>
    %4 = arith.mulf %3, %1 : vector<8x286xf32>
    %c0_4 = arith.constant 0 : index
    %c0_5 = arith.constant 0 : index
    %c0_6 = arith.constant 0 : index
    %5 = vector.load %arg3[%c0_4, %c0_5, %c0_6] : memref<1x8x1xf32, #tpu.memory_space<vmem>>, vector<1x8x1xf32>
    %6 = vector.shape_cast %5 : vector<1x8x1xf32> to vector<8x1xf32>
    %7 = vector.broadcast %6 : vector<8x1xf32> to vector<8x286xf32>
    %8 = arith.addf %4, %7 : vector<8x286xf32>
    %c0_7 = arith.constant 0 : index
    %c0_8 = arith.constant 0 : index
    %c19 = arith.constant 19 : index
    %9 = vector.load %arg5[%c0_7, %c0_8, %c19] : memref<1x8x324xf32, #tpu.memory_space<vmem>>, vector<1x8x286xf32>
    %10 = vector.shape_cast %9 : vector<1x8x286xf32> to vector<8x286xf32>
    %11 = arith.addf %8, %10 : vector<8x286xf32>
    %cst = arith.constant 0.000000e+00 : f32
    %12 = vector.broadcast %cst : f32 to vector<8x286xf32>
    %13 = arith.maximumf %11, %12 : vector<8x286xf32>
    %c0_9 = arith.constant 0 : index
    %c0_10 = arith.constant 0 : index
    %14 = vector.load %arg4[%c0_9, %c0_10] : memref<1x286xf32, #tpu.memory_space<vmem>>, vector<1x286xf32>
    %15 = vector.broadcast %14 : vector<1x286xf32> to vector<8x286xf32>
    %16 = arith.mulf %13, %15 : vector<8x286xf32>
    %cst_11 = arith.constant 0.000000e+00 : f32
    %17 = vector.broadcast %cst_11 : f32 to vector<8x324xf32>
    %c0_12 = arith.constant 0 : index
    %c0_13 = arith.constant 0 : index
    %c0_14 = arith.constant 0 : index
    %18 = vector.load %arg6[%c0_12, %c0_13, %c0_14] : memref<1x8x324xf32, #tpu.memory_space<vmem>>, vector<1x8x324xf32>
    %19 = vector.shape_cast %18 : vector<1x8x324xf32> to vector<8x324xf32>
    %20 = vector.shape_cast %17 : vector<8x324xf32> to vector<1x8x324xf32>
    tpu.vector_store %arg6[%c0_12, %c0_13, %c0_14], %20 {strides = array<i32>} : memref<1x8x324xf32, #tpu.memory_space<vmem>>, vector<1x8x324xf32>,
    %c0_15 = arith.constant 0 : index
    %c0_16 = arith.constant 0 : index
    %c19_17 = arith.constant 19 : index
    %21 = vector.load %arg6[%c0_15, %c0_16, %c19_17] : memref<1x8x324xf32, #tpu.memory_space<vmem>>, vector<1x8x286xf32>
    %22 = vector.shape_cast %21 : vector<1x8x286xf32> to vector<8x286xf32>
    %23 = vector.shape_cast %16 : vector<8x286xf32> to vector<1x8x286xf32>
    tpu.vector_store %arg6[%c0_15, %c0_16, %c19_17], %23 {strides = array<i32>} : memref<1x8x324xf32, #tpu.memory_space<vmem>>, vector<1x8x286xf32>,
    return
  }
  func.func @transform_0(%arg0: i32) -> (i32, i32, i32) {
    %c0_i32 = arith.constant 0 : i32
    %c0_i32_0 = arith.constant 0 : i32
    %c0_i32_1 = arith.constant 0 : i32
    return %arg0, %c0_i32, %c0_i32_0 : i32, i32, i32
  }
  func.func @transform_1(%arg0: i32) -> (i32, i32) {
    %c0_i32 = arith.constant 0 : i32
    %c0_i32_0 = arith.constant 0 : i32
    %c0_i32_1 = arith.constant 0 : i32
    return %c0_i32, %c0_i32_0 : i32, i32
  }
  func.func @transform_2(%arg0: i32) -> (i32, i32, i32) {
    %c0_i32 = arith.constant 0 : i32
    %c0_i32_0 = arith.constant 0 : i32
    %c0_i32_1 = arith.constant 0 : i32
    return %arg0, %c0_i32, %c0_i32_0 : i32, i32, i32
  }
  func.func @transform_3(%arg0: i32) -> (i32, i32) {
    %c0_i32 = arith.constant 0 : i32
    %c0_i32_0 = arith.constant 0 : i32
    %c0_i32_1 = arith.constant 0 : i32
    return %c0_i32, %c0_i32_0 : i32, i32
  }
  func.func @transform_4(%arg0: i32) -> (i32, i32, i32) {
    %c0_i32 = arith.constant 0 : i32
    %c0_i32_0 = arith.constant 0 : i32
    %c0_i32_1 = arith.constant 0 : i32
    return %arg0, %c0_i32, %c0_i32_0 : i32, i32, i32
  }
  func.func @transform_5(%arg0: i32) -> (i32, i32, i32) {
    %c0_i32 = arith.constant 0 : i32
    %c0_i32_0 = arith.constant 0 : i32
    %c0_i32_1 = arith.constant 0 : i32
    return %arg0, %c0_i32, %c0_i32_0 : i32, i32, i32
  }
}

module attributes {stable_mosaic.version = 11 : i64} {
  func.func @kernel(%arg0: i32, %arg1: memref<1x8x286xf32, #tpu.memory_space<vmem>>, %arg2: memref<8x1xf32, #tpu.memory_space<vmem>>, %arg3: memref<1x8x1xf32, #tpu.memory_space<vmem>>, %arg4: memref<1x286xf32, #tpu.memory_space<vmem>>, %arg5: memref<1x8x324xf32, #tpu.memory_space<vmem>>) attributes {dimension_semantics = [#tpu.dimension_semantics<parallel>], iteration_bounds = array<i64: 2>, scalar_prefetch = 0 : i64, scratch_operands = 0 : i64, tpu.core_type = #tpu.core_type<tc>, window_params = [{transform_indices = @transform_0, window_bounds = array<i64: 1, 8, 286>}, {pipeline_mode = #tpu.pipeline_mode<synchronous>, transform_indices = @transform_1, window_bounds = array<i64: 8, 1>}, {transform_indices = @transform_2, window_bounds = array<i64: 1, 8, 1>}, {pipeline_mode = #tpu.pipeline_mode<synchronous>, transform_indices = @transform_3, window_bounds = array<i64: 1, 286>}, {transform_indices = @transform_4, window_bounds = array<i64: 1, 8, 324>}]} {
    %c0 = arith.constant 0 : index
    %c0_0 = arith.constant 0 : index
    %c0_1 = arith.constant 0 : index
    %0 = vector.load %arg1[%c0, %c0_0, %c0_1] : memref<1x8x286xf32, #tpu.memory_space<vmem>>, vector<1x8x286xf32>
    %1 = vector.shape_cast %0 : vector<1x8x286xf32> to vector<8x286xf32>
    %c0_2 = arith.constant 0 : index
    %c0_3 = arith.constant 0 : index
    %2 = vector.load %arg2[%c0_2, %c0_3] : memref<8x1xf32, #tpu.memory_space<vmem>>, vector<8x1xf32>
    %3 = vector.broadcast %2 : vector<8x1xf32> to vector<8x286xf32>
    %4 = arith.mulf %3, %1 : vector<8x286xf32>
    %c0_4 = arith.constant 0 : index
    %c0_5 = arith.constant 0 : index
    %c0_6 = arith.constant 0 : index
    %5 = vector.load %arg3[%c0_4, %c0_5, %c0_6] : memref<1x8x1xf32, #tpu.memory_space<vmem>>, vector<1x8x1xf32>
    %6 = vector.shape_cast %5 : vector<1x8x1xf32> to vector<8x1xf32>
    %7 = vector.broadcast %6 : vector<8x1xf32> to vector<8x286xf32>
    %8 = arith.addf %4, %7 : vector<8x286xf32>
    %cst = arith.constant 0.000000e+00 : f32
    %9 = vector.broadcast %cst : f32 to vector<8x286xf32>
    %10 = arith.maximumf %8, %9 : vector<8x286xf32>
    %c0_7 = arith.constant 0 : index
    %c0_8 = arith.constant 0 : index
    %11 = vector.load %arg4[%c0_7, %c0_8] : memref<1x286xf32, #tpu.memory_space<vmem>>, vector<1x286xf32>
    %12 = vector.broadcast %11 : vector<1x286xf32> to vector<8x286xf32>
    %13 = arith.mulf %10, %12 : vector<8x286xf32>
    %cst_9 = arith.constant 0.000000e+00 : f32
    %14 = vector.broadcast %cst_9 : f32 to vector<8x324xf32>
    %c0_10 = arith.constant 0 : index
    %c0_11 = arith.constant 0 : index
    %c0_12 = arith.constant 0 : index
    %15 = vector.load %arg5[%c0_10, %c0_11, %c0_12] : memref<1x8x324xf32, #tpu.memory_space<vmem>>, vector<1x8x324xf32>
    %16 = vector.shape_cast %15 : vector<1x8x324xf32> to vector<8x324xf32>
    %17 = vector.shape_cast %14 : vector<8x324xf32> to vector<1x8x324xf32>
    tpu.vector_store %arg5[%c0_10, %c0_11, %c0_12], %17 {strides = array<i32>} : memref<1x8x324xf32, #tpu.memory_space<vmem>>, vector<1x8x324xf32>,
    %c0_13 = arith.constant 0 : index
    %c0_14 = arith.constant 0 : index
    %c19 = arith.constant 19 : index
    %18 = vector.load %arg5[%c0_13, %c0_14, %c19] : memref<1x8x324xf32, #tpu.memory_space<vmem>>, vector<1x8x286xf32>
    %19 = vector.shape_cast %18 : vector<1x8x286xf32> to vector<8x286xf32>
    %20 = vector.shape_cast %13 : vector<8x286xf32> to vector<1x8x286xf32>
    tpu.vector_store %arg5[%c0_13, %c0_14, %c19], %20 {strides = array<i32>} : memref<1x8x324xf32, #tpu.memory_space<vmem>>, vector<1x8x286xf32>,
    return
  }
  func.func @transform_0(%arg0: i32) -> (i32, i32, i32) {
    %c0_i32 = arith.constant 0 : i32
    %c0_i32_0 = arith.constant 0 : i32
    %c0_i32_1 = arith.constant 0 : i32
    return %arg0, %c0_i32, %c0_i32_0 : i32, i32, i32
  }
  func.func @transform_1(%arg0: i32) -> (i32, i32) {
    %c0_i32 = arith.constant 0 : i32
    %c0_i32_0 = arith.constant 0 : i32
    %c0_i32_1 = arith.constant 0 : i32
    return %c0_i32, %c0_i32_0 : i32, i32
  }
  func.func @transform_2(%arg0: i32) -> (i32, i32, i32) {
    %c0_i32 = arith.constant 0 : i32
    %c0_i32_0 = arith.constant 0 : i32
    %c0_i32_1 = arith.constant 0 : i32
    return %arg0, %c0_i32, %c0_i32_0 : i32, i32, i32
  }
  func.func @transform_3(%arg0: i32) -> (i32, i32) {
    %c0_i32 = arith.constant 0 : i32
    %c0_i32_0 = arith.constant 0 : i32
    %c0_i32_1 = arith.constant 0 : i32
    return %c0_i32, %c0_i32_0 : i32, i32
  }
  func.func @transform_4(%arg0: i32) -> (i32, i32, i32) {
    %c0_i32 = arith.constant 0 : i32
    %c0_i32_0 = arith.constant 0 : i32
    %c0_i32_1 = arith.constant 0 : i32
    return %arg0, %c0_i32, %c0_i32_0 : i32, i32, i32
  }
}

</mosaic_0001>

<llo_original>
// kernel: squeeze.4
$region0: #{squeeze.4}
  %s0 = inlined_call_operand.vmem [shape: f32[2,8], index: 0, kind: input, shape index: {}]
  %s1 = inlined_call_operand.vmem [shape: f32[2,4,2], index: 1, kind: output, shape index: {}]
  $region1: #{squeeze.4} parent=0
    #allocation0 [shape = 'u8[8192]{0}', space=vmem, size = 0x2000, scoped, tag = 'scoped mem for output reshape']
    #allocation1 [shape = 'u8[4096]{0}', space=vmem, size = 0x1000, scoped, tag = 'scoped mem for input reshape']
    %s3 = sshllo.u32 0, 2
    %v4 = vld [vmem:[%s0] sm:%s3]
    %5 = vst [vmem:[#allocation1] sm:%s3] %v4
    %v6 = vld [vmem:[#allocation1] sm:$0x3]
    %vm7 = vcmask 15360
    %8 = vst.msk [vmem:[#allocation0] ss:$8 sm:$0x3] %vm7, %v6
    %v9 = vld [vmem:[#allocation1] sm:$0x3]
    %10 = vrot.lane.b32.xlu0 %v9, 126
    %v11 = vpop.permute.xlu0 %10
    %vm12 = vcmask 15360
    %s13 = scalar_lea.vmem [#allocation0], 1
    %14 = vst.msk [vmem:[%s13] ss:$8 sm:$0x3] %vm12, %v11
    %v15 = vld [vmem:[#allocation1] sm:$0x3]
    %16 = vrot.lane.b32.xlu0 %v15, 124
    %v17 = vpop.permute.xlu0 %16
    %vm18 = vcmask 15360
    %s19 = scalar_lea.vmem [#allocation0], 2
    %20 = vst.msk [vmem:[%s19] ss:$8 sm:$0x3] %vm18, %v17
    %v21 = vld [vmem:[#allocation1] sm:$0x3]
    %22 = vrot.lane.b32.xlu0 %v21, 122
    %v23 = vpop.permute.xlu0 %22
    %vm24 = vcmask 15360
    %s25 = scalar_lea.vmem [#allocation0], 3
    %26 = vst.msk [vmem:[%s25] ss:$8 sm:$0x3] %vm24, %v23
    %s28 = sshllo.u32 0, 4
    %v30 = vld [vmem:[#allocation0] sm:%s28]
    %s31 = sshllo.u32 0, 4
    %32 = vst [vmem:[%s1] sm:%s31] %v30
    %s33 = scalar_lea.vmem [#allocation0], 8
    %v34 = vld [vmem:[%s33] sm:%s28]
    %s35 = sshllo.u32 0, 4
    %s36 = scalar_lea.vmem %s1, 4
    %37 = vst [vmem:[%s36] sm:%s35] %v34

// kernel: residual_block_pallas.7
$region0: #{residual_block_pallas.7}
  #allocation0 [shape = 'u32[]', space=smem, size = 0x4, offset = 0x4, fixed_abs, tag = 'smem constant byte address 0x4 - core index']
  #allocation1 [shape = 'u32[144,128]{1,0:T(1,128)}', space=vmem, size = 0x12000, scoped, tag = 'internal scratch']
  %s0 = inlined_call_operand.vmem [shape: f32[2,8,286], index: 0, kind: input, shape index: {}]
  %s1 = inlined_call_operand.vmem [shape: f32[8,1], index: 1, kind: input, shape index: {}]
  %s2 = inlined_call_operand.vmem [shape: f32[2,8,1], index: 2, kind: input, shape index: {}]
  %s3 = inlined_call_operand.vmem [shape: f32[1,286], index: 3, kind: input, shape index: {}]
  %s4 = inlined_call_operand.vmem [shape: f32[2,8,324], index: 4, kind: input, shape index: {}]
  %s5 = inlined_call_operand.vmem [shape: f32[2,8,324], index: 5, kind: output, shape index: {}]
  %s6 = sld [smem:[#allocation0]]
  $region53: #{residual_block_pallas.7} parent=0
    _
  %s8 = ssub.s32 1, %s6
  %s9 = scalar_select 0, %s8, %s6
  loop: start=0, step=1, limit=4
  $region2: #{residual_block_pallas.7} parent=0 // loop_pre_header
    _
  $region3: #{residual_block_pallas.7} parent=0 // loop_header
    %s11 = sphi 0, %s15
    %p12 = scmp.ge.s32.totalorder %s11, 4
    %s21 = sphi 0, %s23
    %s24 = sphi 0, %s21
    %s25 = sphi 0, %s24
    %s41 = sphi 0, %s25
    %s45 = sphi 0, %s45
    %s47 = sphi 0, %s45
    %s48 = sphi 0, %s47
    %s62 = sphi 0, %s48
    %s68 = sphi 0, %s70
    %s71 = sphi 0, %s68
    %s72 = sphi 0, %s71
    %s88 = sphi 0, %s72
    %s92 = sphi 0, %s92
    %s94 = sphi 0, %s92
    %s95 = sphi 0, %s94
    %s109 = sphi 0, %s95
    %s115 = sphi 0, %s117
    %s118 = sphi 0, %s115
    %s119 = sphi 0, %s118
    %s135 = sphi 0, %s119
    %s141 = sphi 0, %s143
    %s144 = sphi 0, %s141
    %s145 = sphi 0, %s144
    %s161 = sphi 0, %s145
  $region4: #{residual_block_pallas.7} parent=0 // loop_header_branch
    %14 = sbr.rel (%p12) target = $region8
  $region5: #{residual_block_pallas.7} parent=0 // loop_body
    %s16 = ssub.s32 %s11, 1
    %s17 = ssub.s32 %s11, 2
    %s18 = sadd.s32 %s11, 1
    %s19 = ssub.s32 %s11, %s18
    %p20 = scmp.eq.s32.totalorder %s19, 0
    %s22 = sadd.s32 %s21, 1
    %s23 = scalar_select %p20, %s21, %s22
    %p26 = pneg %p20
    %p27 = scmp.eq.s32.totalorder %s11, 1
    %p28 = por %p26, %p27
    %p29 = scmp.ne.s32.totalorder %s21, %s24
    %p30 = scmp.eq.s32.totalorder %s11, 0
    %p31 = por %p29, %p30
    %p32 = scmp.ne.s32.totalorder %s21, %s24
    %p33 = scmp.eq.s32.totalorder %s16, 1
    %p34 = por %p32, %p33
    %p35 = scmp.ne.s32.totalorder %s24, %s25
    %p36 = scmp.eq.s32.totalorder %s16, 0
    %p37 = por %p35, %p36
    %p38 = scmp.ne.s32.totalorder %s24, %s25
    %p39 = scmp.eq.s32.totalorder %s17, 1
    %p40 = por %p38, %p39
    %p42 = scmp.ne.s32.totalorder %s25, %s41
    %p43 = scmp.eq.s32.totalorder %s17, 0
    %p44 = por %p42, %p43
    %s46 = sadd.s32 %s45, 1
    %p49 = scmp.eq.s32.totalorder %s11, 1
    %p50 = scmp.ne.s32.totalorder %s45, %s47
    %p51 = scmp.eq.s32.totalorder %s11, 0
    %p52 = por %p50, %p51
    %p53 = scmp.ne.s32.totalorder %s45, %s47
    %p54 = scmp.eq.s32.totalorder %s16, 1
    %p55 = por %p53, %p54
    %p56 = scmp.ne.s32.totalorder %s47, %s48
    %p57 = scmp.eq.s32.totalorder %s16, 0
    %p58 = por %p56, %p57
    %p59 = scmp.ne.s32.totalorder %s47, %s48
    %p60 = scmp.eq.s32.totalorder %s17, 1
    %p61 = por %p59, %p60
    %p63 = scmp.ne.s32.totalorder %s48, %s62
    %p64 = scmp.eq.s32.totalorder %s17, 0
    %p65 = por %p63, %p64
    %s66 = ssub.s32 %s11, %s18
    %p67 = scmp.eq.s32.totalorder %s66, 0
    %s69 = sadd.s32 %s68, 1
    %s70 = scalar_select %p67, %s68, %s69
    %p73 = pneg %p67
    %p74 = scmp.eq.s32.totalorder %s11, 1
    %p75 = por %p73, %p74
    %p76 = scmp.ne.s32.totalorder %s68, %s71
    %p77 = scmp.eq.s32.totalorder %s11, 0
    %p78 = por %p76, %p77
    %p79 = scmp.ne.s32.totalorder %s68, %s71
    %p80 = scmp.eq.s32.totalorder %s16, 1
    %p81 = por %p79, %p80
    %p82 = scmp.ne.s32.totalorder %s71, %s72
    %p83 = scmp.eq.s32.totalorder %s16, 0
    %p84 = por %p82, %p83
    %p85 = scmp.ne.s32.totalorder %s71, %s72
    %p86 = scmp.eq.s32.totalorder %s17, 1
    %p87 = por %p85, %p86
    %p89 = scmp.ne.s32.totalorder %s72, %s88
    %p90 = scmp.eq.s32.totalorder %s17, 0
    %p91 = por %p89, %p90
    %s93 = sadd.s32 %s92, 1
    %p96 = scmp.eq.s32.totalorder %s11, 1
    %p97 = scmp.ne.s32.totalorder %s92, %s94
    %p98 = scmp.eq.s32.totalorder %s11, 0
    %p99 = por %p97, %p98
    %p100 = scmp.ne.s32.totalorder %s92, %s94
    %p101 = scmp.eq.s32.totalorder %s16, 1
    %p102 = por %p100, %p101
    %p103 = scmp.ne.s32.totalorder %s94, %s95
    %p104 = scmp.eq.s32.totalorder %s16, 0
    %p105 = por %p103, %p104
    %p106 = scmp.ne.s32.totalorder %s94, %s95
    %p107 = scmp.eq.s32.totalorder %s17, 1
    %p108 = por %p106, %p107
    %p110 = scmp.ne.s32.totalorder %s95, %s109
    %p111 = scmp.eq.s32.totalorder %s17, 0
    %p112 = por %p110, %p111
    %s113 = ssub.s32 %s11, %s18
    %p114 = scmp.eq.s32.totalorder %s113, 0
    %s116 = sadd.s32 %s115, 1
    %s117 = scalar_select %p114, %s115, %s116
    %p120 = pneg %p114
    %p121 = scmp.eq.s32.totalorder %s11, 1
    %p122 = por %p120, %p121
    %p123 = scmp.ne.s32.totalorder %s115, %s118
    %p124 = scmp.eq.s32.totalorder %s11, 0
    %p125 = por %p123, %p124
    %p126 = scmp.ne.s32.totalorder %s115, %s118
    %p127 = scmp.eq.s32.totalorder %s16, 1
    %p128 = por %p126, %p127
    %p129 = scmp.ne.s32.totalorder %s118, %s119
    %p130 = scmp.eq.s32.totalorder %s16, 0
    %p131 = por %p129, %p130
    %p132 = scmp.ne.s32.totalorder %s118, %s119
    %p133 = scmp.eq.s32.totalorder %s17, 1
    %p134 = por %p132, %p133
    %p136 = scmp.ne.s32.totalorder %s119, %s135
    %p137 = scmp.eq.s32.totalorder %s17, 0
    %p138 = por %p136, %p137
    %s139 = ssub.s32 %s11, %s18
    %p140 = scmp.eq.s32.totalorder %s139, 0
    %s142 = sadd.s32 %s141, 1
    %s143 = scalar_select %p140, %s141, %s142
    %p146 = pneg %p140
    %p147 = scmp.eq.s32.totalorder %s11, 1
    %p148 = por %p146, %p147
    %p149 = scmp.ne.s32.totalorder %s141, %s144
    %p150 = scmp.eq.s32.totalorder %s11, 0
    %p151 = por %p149, %p150
    %p152 = scmp.ne.s32.totalorder %s141, %s144
    %p153 = scmp.eq.s32.totalorder %s16, 1
    %p154 = por %p152, %p153
    %p155 = scmp.ne.s32.totalorder %s144, %s145
    %p156 = scmp.eq.s32.totalorder %s16, 0
    %p157 = por %p155, %p156
    %p158 = scmp.ne.s32.totalorder %s144, %s145
    %p159 = scmp.eq.s32.totalorder %s17, 1
    %p160 = por %p158, %p159
    %p162 = scmp.ne.s32.totalorder %s145, %s161
    %p163 = scmp.eq.s32.totalorder %s17, 0
    %p164 = por %p162, %p163
    %p165 = scmp.le.s32.totalorder 1, %s11
    %p166 = scmp.lt.s32.totalorder %s11, 3
    %p167 = pnand %p165, %p166
    %p168 = pneg %p167
    // Predicated region
    $region9: #{residual_block_pallas.7} parent=5 // pred_check
      _
    $region10: #{residual_block_pallas.7} parent=5 // pred_check_branch
      %170 = sbr.rel (%p167) target = $region12
    $region11: #{residual_block_pallas.7} parent=5 // pred_region
      %s171 = ssub.s32 %s11, 1
      // Predicated region
      $region13: #{residual_block_pallas.7} parent=11 // pred_check
        %p172 = pneg %p58
      $region14: #{residual_block_pallas.7} parent=11 // pred_check_branch
        %174 = sbr.rel (%p172) target = $region16
      $region15: #{residual_block_pallas.7} parent=11 // pred_region
        _
      $region16: #{residual_block_pallas.7} parent=11 // pred_fallthru
        _
      // Predicated region
      $region17: #{residual_block_pallas.7} parent=11 // pred_check
        %p175 = pneg %p105
      $region18: #{residual_block_pallas.7} parent=11 // pred_check_branch
        %177 = sbr.rel (%p175) target = $region20
      $region19: #{residual_block_pallas.7} parent=11 // pred_region
        _
      $region20: #{residual_block_pallas.7} parent=11 // pred_fallthru
        _
    $region12: #{residual_block_pallas.7} parent=5 // pred_fallthru
      _
    %p178 = scmp.lt.s32.totalorder %s11, 2
    // Predicated region
    $region21: #{residual_block_pallas.7} parent=5 // pred_check
      %p179 = pneg %p178
    $region22: #{residual_block_pallas.7} parent=5 // pred_check_branch
      %181 = sbr.rel (%p179) target = $region24
    $region23: #{residual_block_pallas.7} parent=5 // pred_region
      // Predicated region
      $region25: #{residual_block_pallas.7} parent=23 // pred_check
        %p182 = pneg %p31
      $region26: #{residual_block_pallas.7} parent=23 // pred_check_branch
        %184 = sbr.rel (%p182) target = $region28
      $region27: #{residual_block_pallas.7} parent=23 // pred_region
        %p185 = scmp.lt.s32.totalorder %s11, 1
        %s186 = scalar_select %p185, %s11, 1
        %s187 = smul.addr %s186, 3
        %s188 = smul.addr %s187, 8
        %s189 = scalar_lea.vmem %s0, %s188
      $region28: #{residual_block_pallas.7} parent=23 // pred_fallthru
        _
      // Predicated region
      $region29: #{residual_block_pallas.7} parent=23 // pred_check
        %p190 = pneg %p78
      $region30: #{residual_block_pallas.7} parent=23 // pred_check_branch
        %192 = sbr.rel (%p190) target = $region32
      $region31: #{residual_block_pallas.7} parent=23 // pred_region
        %p193 = scmp.lt.s32.totalorder %s11, 1
        %s194 = scalar_select %p193, %s11, 1
        %s195 = smul.addr %s194, 8
        %s196 = scalar_lea.vmem %s2, %s195
      $region32: #{residual_block_pallas.7} parent=23 // pred_fallthru
        _
      // Predicated region
      $region33: #{residual_block_pallas.7} parent=23 // pred_check
        %p197 = pneg %p125
      $region34: #{residual_block_pallas.7} parent=23 // pred_check_branch
        %199 = sbr.rel (%p197) target = $region36
      $region35: #{residual_block_pallas.7} parent=23 // pred_region
        %p200 = scmp.lt.s32.totalorder %s11, 1
        %s201 = scalar_select %p200, %s11, 1
        %s202 = smul.addr %s201, 3
        %s203 = smul.addr %s202, 8
        %s204 = scalar_lea.vmem %s4, %s203
      $region36: #{residual_block_pallas.7} parent=23 // pred_fallthru
        _
    $region24: #{residual_block_pallas.7} parent=5 // pred_fallthru
      _
    %p205 = scmp.le.s32.totalorder 1, %s11
    %p206 = scmp.lt.s32.totalorder %s11, 3
    %p207 = pnand %p205, %p206
    %p208 = pneg %p207
    // Predicated region
    $region37: #{residual_block_pallas.7} parent=5 // pred_check
      _
    $region38: #{residual_block_pallas.7} parent=5 // pred_check_branch
      %210 = sbr.rel (%p207) target = $region40
    $region39: #{residual_block_pallas.7} parent=5 // pred_region
      %s211 = ssub.s32 %s11, 1
      %p212 = scmp.lt.s32.totalorder %s16, 1
      %s213 = scalar_select %p212, %s16, 1
      %s214 = smul.addr %s213, 3
      %s215 = smul.addr %s214, 8
      %s216 = scalar_lea.vmem %s0, %s215
      %p217 = pneg %p37
      %p218 = pneg %p34
      %p219 = pneg %p58
      %p220 = pneg %p55
      %p221 = scmp.lt.s32.totalorder %s16, 1
      %s222 = scalar_select %p221, %s16, 1
      %s223 = smul.addr %s222, 8
      %s224 = scalar_lea.vmem %s2, %s223
      %p225 = pneg %p84
      %p226 = pneg %p81
      %p227 = pneg %p105
      %p228 = pneg %p102
      %p229 = scmp.lt.s32.totalorder %s16, 1
      %s230 = scalar_select %p229, %s16, 1
      %s231 = smul.addr %s230, 3
      %s232 = smul.addr %s231, 8
      %s233 = scalar_lea.vmem %s4, %s232
      %p234 = pneg %p131
      %p235 = pneg %p128
      %p236 = pneg %p157
      %p237 = pneg %p154
      %p238 = scmp.lt.s32.totalorder %s16, 1
      %s239 = scalar_select %p238, %s16, 1
      %s240 = smul.addr %s239, 3
      %s241 = smul.addr %s240, 8
      %s242 = scalar_lea.vmem %s5, %s241
      %p243 = scmp.lt.s32.totalorder %s16, 1
      %s244 = scalar_select %p243, %s16, 1
      %s245 = smul.addr %s244, 3
      %s246 = smul.addr %s245, 8
      %s247 = scalar_lea.vmem %s0, %s246
      %p248 = scmp.lt.s32.totalorder %s16, 1
      %s249 = scalar_select %p248, %s16, 1
      %s250 = smul.addr %s249, 8
      %s251 = scalar_lea.vmem %s2, %s250
      %p252 = scmp.lt.s32.totalorder %s16, 1
      %s253 = scalar_select %p252, %s16, 1
      %s254 = smul.addr %s253, 3
      %s255 = smul.addr %s254, 8
      %s256 = scalar_lea.vmem %s4, %s255
      %p257 = scmp.lt.s32.totalorder %s16, 1
      %s258 = scalar_select %p257, %s16, 1
      %s259 = smul.addr %s258, 3
      %s260 = smul.addr %s259, 8
      %s261 = scalar_lea.vmem %s5, %s260
      %v262 = vld [vmem:[%s247] sm:$0xff]
      %v263 = vld [vmem:[%s247 + $0x8] sm:$0xff]
      %v264 = vld [vmem:[%s247 + $0x10] sm:$0xff]
      %v265 = vld [vmem:[%s1] sm:$0xff]
      %267 = vset.pattern.permute.xlu0 0
      %268 = vperm.xlu0 %267, %v265
      %v269 = vpop.permute.xlu0 %268
      %v271 = vmul.f32 %v269, %v262
      %v272 = vmul.f32 %v269, %v263
      %v273 = vmul.f32 %v269, %v264
      %v274 = vld [vmem:[%s251] sm:$0xff]
      %276 = vset.pattern.permute.xlu0 0
      %277 = vperm.xlu0 %276, %v274
      %v278 = vpop.permute.xlu0 %277
      %v280 = vadd.f32 %v271, %v278
      %v281 = vadd.f32 %v272, %v278
      %v282 = vadd.f32 %v273, %v278
      %v283 = vld [vmem:[%s256] sm:$0xff]
      %v284 = vld [vmem:[%s256 + $0x8] sm:$0xff]
      %v285 = vld [vmem:[%s256 + $0x10] sm:$0xff]
      %289 = vrot.lane.b32.xlu0 %v283, 109
      %v290 = vpop.permute.xlu0 %289
      %291 = vrot.lane.b32.xlu0 %v284, 109
      %v292 = vpop.permute.xlu0 %291
      %293 = vrot.lane.b32.xlu0 %v285, 109
      %v294 = vpop.permute.xlu0 %293
      %vm295 = vcmask 891904
      %v296 = vsel %vm295, %v290, %v292
      %v297 = vsel %vm295, %v292, %v294
      %v301 = vadd.f32 %v280, %v296
      %v302 = vadd.f32 %v281, %v297
      %v303 = vadd.f32 %v282, %v294
      %v304 = vmax.f32 %v301, 0.0
      %v305 = vmax.f32 %v302, 0.0
      %v306 = vmax.f32 %v303, 0.0
      %v307 = vld [vmem:[%s3] sm:$0x7]
      %v309 = vlaneseq
      %v310 = vshrl.u32 %v309, 7
      %v311 = vsub.s32 0, %v310
      %v312 = vrot.slane %v307, %v311
      %v313 = vlaneseq
      %v314 = vshrl.u32 %v313, 7
      %v315 = vsub.s32 1, %v314
      %v316 = vrot.slane %v307, %v315
      %v317 = vlaneseq
      %v318 = vshrl.u32 %v317, 7
      %v319 = vsub.s32 2, %v318
      %v320 = vrot.slane %v307, %v319
      %v324 = vmul.f32 %v304, %v312
      %v325 = vmul.f32 %v305, %v316
      %v326 = vmul.f32 %v306, %v320
      %327 = vst [vmem:[%s261] sm:$0xff] 0.0
      %328 = vst [vmem:[%s261 + $0x8] sm:$0xff] 0.0
      %vm329 = vcmask 556032
      %330 = vst.msk [vmem:[%s261 + $0x10] sm:$0xff] %vm329, 0.0
      %334 = vrot.lane.b32.xlu0 %v324, 19
      %v335 = vpop.permute.xlu0 %334
      %336 = vrot.lane.b32.xlu0 %v325, 19
      %v337 = vpop.permute.xlu0 %336
      %338 = vrot.lane.b32.xlu0 %v326, 19
      %v339 = vpop.permute.xlu0 %338
      %vm340 = vcmask 154624
      %v341 = vsel %vm340, %v335, %v337
      %v342 = vsel %vm340, %v337, %v339
      %vm346 = vcmask 1047704
      %347 = vst.msk [vmem:[%s261] sm:$0xff] %vm346, %v335
      %348 = vst [vmem:[%s261 + $0x8] sm:$0xff] %v341
      %vm349 = vcmask 400384
      %350 = vst.msk [vmem:[%s261 + $0x10] sm:$0xff] %vm349, %v342
      %p351 = scmp.lt.s32.totalorder %s16, 1
      %s352 = scalar_select %p351, %s16, 1
      %s353 = smul.addr %s352, 3
      %s354 = smul.addr %s353, 8
      %s355 = scalar_lea.vmem %s5, %s354
      // Predicated region
      $region41: #{residual_block_pallas.7} parent=39 // pred_check
        %p356 = pneg %p154
      $region42: #{residual_block_pallas.7} parent=39 // pred_check_branch
        %358 = sbr.rel (%p356) target = $region44
      $region43: #{residual_block_pallas.7} parent=39 // pred_region
        _
      $region44: #{residual_block_pallas.7} parent=39 // pred_fallthru
        _
    $region40: #{residual_block_pallas.7} parent=5 // pred_fallthru
      _
    %p359 = scmp.le.s32.totalorder 2, %s11
    // Predicated region
    $region45: #{residual_block_pallas.7} parent=5 // pred_check
      %p360 = pneg %p359
    $region46: #{residual_block_pallas.7} parent=5 // pred_check_branch
      %362 = sbr.rel (%p360) target = $region48
    $region47: #{residual_block_pallas.7} parent=5 // pred_region
      %s363 = ssub.s32 %s11, 2
      // Predicated region
      $region49: #{residual_block_pallas.7} parent=47 // pred_check
        %p364 = pneg %p160
      $region50: #{residual_block_pallas.7} parent=47 // pred_check_branch
        %366 = sbr.rel (%p364) target = $region52
      $region51: #{residual_block_pallas.7} parent=47 // pred_region
        %p367 = scmp.lt.s32.totalorder %s17, 1
        %s368 = scalar_select %p367, %s17, 1
        %s369 = smul.addr %s368, 3
        %s370 = smul.addr %s369, 8
        %s371 = scalar_lea.vmem %s5, %s370
      $region52: #{residual_block_pallas.7} parent=47 // pred_fallthru
        _
    $region48: #{residual_block_pallas.7} parent=5 // pred_fallthru
      _
  $region6: #{residual_block_pallas.7} parent=0 // loop_footer
    %s15 = sadd.s32 1, %s11
  $region7: #{residual_block_pallas.7} parent=0 // loop_footer_branch
    %10 = sbr.rel target = $region3
  $region8: #{residual_block_pallas.7} parent=0 // loop_exit
    _

// kernel: residual_block_pallas.4
$region0: #{residual_block_pallas.4}
  #allocation0 [shape = 'u32[]', space=smem, size = 0x4, offset = 0x4, fixed_abs, tag = 'smem constant byte address 0x4 - core index']
  #allocation1 [shape = 'u32[144,128]{1,0:T(1,128)}', space=vmem, size = 0x12000, scoped, tag = 'internal scratch']
  %s0 = inlined_call_operand.vmem [shape: f32[2,8,324], index: 0, kind: input, shape index: {}]
  %s1 = inlined_call_operand.vmem [shape: bf16[8,72], index: 1, kind: input, shape index: {}]
  %s2 = inlined_call_operand.vmem [shape: f32[1,286], index: 2, kind: input, shape index: {}]
  %s3 = inlined_call_operand.vmem [shape: f32[2,8,286], index: 3, kind: output, shape index: {0}]
  %s4 = inlined_call_operand.vmem [shape: f32[2,8,2], index: 4, kind: output, shape index: {1}]
  %5 = xla_tuple %s3, %s4
  %s6 = sld [smem:[#allocation0]]
  $region53: #{residual_block_pallas.4} parent=0
    _
  %s8 = ssub.s32 1, %s6
  %s9 = scalar_select 0, %s8, %s6
  loop: start=0, step=1, limit=4
  $region2: #{residual_block_pallas.4} parent=0 // loop_pre_header
    _
  $region3: #{residual_block_pallas.4} parent=0 // loop_header
    %s11 = sphi 0, %s15
    %p12 = scmp.ge.s32.totalorder %s11, 4
    %s21 = sphi 0, %s23
    %s24 = sphi 0, %s21
    %s25 = sphi 0, %s24
    %s41 = sphi 0, %s25
    %s45 = sphi 0, %s45
    %s47 = sphi 0, %s45
    %s48 = sphi 0, %s47
    %s62 = sphi 0, %s48
    %s66 = sphi 0, %s66
    %s68 = sphi 0, %s66
    %s69 = sphi 0, %s68
    %s83 = sphi 0, %s69
    %s89 = sphi 0, %s91
    %s92 = sphi 0, %s89
    %s93 = sphi 0, %s92
    %s109 = sphi 0, %s93
    %s115 = sphi 0, %s117
    %s118 = sphi 0, %s115
    %s119 = sphi 0, %s118
    %s135 = sphi 0, %s119
  $region4: #{residual_block_pallas.4} parent=0 // loop_header_branch
    %14 = sbr.rel (%p12) target = $region8
  $region5: #{residual_block_pallas.4} parent=0 // loop_body
    %s16 = ssub.s32 %s11, 1
    %s17 = ssub.s32 %s11, 2
    %s18 = sadd.s32 %s11, 1
    %s19 = ssub.s32 %s11, %s18
    %p20 = scmp.eq.s32.totalorder %s19, 0
    %s22 = sadd.s32 %s21, 1
    %s23 = scalar_select %p20, %s21, %s22
    %p26 = pneg %p20
    %p27 = scmp.eq.s32.totalorder %s11, 1
    %p28 = por %p26, %p27
    %p29 = scmp.ne.s32.totalorder %s21, %s24
    %p30 = scmp.eq.s32.totalorder %s11, 0
    %p31 = por %p29, %p30
    %p32 = scmp.ne.s32.totalorder %s21, %s24
    %p33 = scmp.eq.s32.totalorder %s16, 1
    %p34 = por %p32, %p33
    %p35 = scmp.ne.s32.totalorder %s24, %s25
    %p36 = scmp.eq.s32.totalorder %s16, 0
    %p37 = por %p35, %p36
    %p38 = scmp.ne.s32.totalorder %s24, %s25
    %p39 = scmp.eq.s32.totalorder %s17, 1
    %p40 = por %p38, %p39
    %p42 = scmp.ne.s32.totalorder %s25, %s41
    %p43 = scmp.eq.s32.totalorder %s17, 0
    %p44 = por %p42, %p43
    %s46 = sadd.s32 %s45, 1
    %p49 = scmp.eq.s32.totalorder %s11, 1
    %p50 = scmp.ne.s32.totalorder %s45, %s47
    %p51 = scmp.eq.s32.totalorder %s11, 0
    %p52 = por %p50, %p51
    %p53 = scmp.ne.s32.totalorder %s45, %s47
    %p54 = scmp.eq.s32.totalorder %s16, 1
    %p55 = por %p53, %p54
    %p56 = scmp.ne.s32.totalorder %s47, %s48
    %p57 = scmp.eq.s32.totalorder %s16, 0
    %p58 = por %p56, %p57
    %p59 = scmp.ne.s32.totalorder %s47, %s48
    %p60 = scmp.eq.s32.totalorder %s17, 1
    %p61 = por %p59, %p60
    %p63 = scmp.ne.s32.totalorder %s48, %s62
    %p64 = scmp.eq.s32.totalorder %s17, 0
    %p65 = por %p63, %p64
    %s67 = sadd.s32 %s66, 1
    %p70 = scmp.eq.s32.totalorder %s11, 1
    %p71 = scmp.ne.s32.totalorder %s66, %s68
    %p72 = scmp.eq.s32.totalorder %s11, 0
    %p73 = por %p71, %p72
    %p74 = scmp.ne.s32.totalorder %s66, %s68
    %p75 = scmp.eq.s32.totalorder %s16, 1
    %p76 = por %p74, %p75
    %p77 = scmp.ne.s32.totalorder %s68, %s69
    %p78 = scmp.eq.s32.totalorder %s16, 0
    %p79 = por %p77, %p78
    %p80 = scmp.ne.s32.totalorder %s68, %s69
    %p81 = scmp.eq.s32.totalorder %s17, 1
    %p82 = por %p80, %p81
    %p84 = scmp.ne.s32.totalorder %s69, %s83
    %p85 = scmp.eq.s32.totalorder %s17, 0
    %p86 = por %p84, %p85
    %s87 = ssub.s32 %s11, %s18
    %p88 = scmp.eq.s32.totalorder %s87, 0
    %s90 = sadd.s32 %s89, 1
    %s91 = scalar_select %p88, %s89, %s90
    %p94 = pneg %p88
    %p95 = scmp.eq.s32.totalorder %s11, 1
    %p96 = por %p94, %p95
    %p97 = scmp.ne.s32.totalorder %s89, %s92
    %p98 = scmp.eq.s32.totalorder %s11, 0
    %p99 = por %p97, %p98
    %p100 = scmp.ne.s32.totalorder %s89, %s92
    %p101 = scmp.eq.s32.totalorder %s16, 1
    %p102 = por %p100, %p101
    %p103 = scmp.ne.s32.totalorder %s92, %s93
    %p104 = scmp.eq.s32.totalorder %s16, 0
    %p105 = por %p103, %p104
    %p106 = scmp.ne.s32.totalorder %s92, %s93
    %p107 = scmp.eq.s32.totalorder %s17, 1
    %p108 = por %p106, %p107
    %p110 = scmp.ne.s32.totalorder %s93, %s109
    %p111 = scmp.eq.s32.totalorder %s17, 0
    %p112 = por %p110, %p111
    %s113 = ssub.s32 %s11, %s18
    %p114 = scmp.eq.s32.totalorder %s113, 0
    %s116 = sadd.s32 %s115, 1
    %s117 = scalar_select %p114, %s115, %s116
    %p120 = pneg %p114
    %p121 = scmp.eq.s32.totalorder %s11, 1
    %p122 = por %p120, %p121
    %p123 = scmp.ne.s32.totalorder %s115, %s118
    %p124 = scmp.eq.s32.totalorder %s11, 0
    %p125 = por %p123, %p124
    %p126 = scmp.ne.s32.totalorder %s115, %s118
    %p127 = scmp.eq.s32.totalorder %s16, 1
    %p128 = por %p126, %p127
    %p129 = scmp.ne.s32.totalorder %s118, %s119
    %p130 = scmp.eq.s32.totalorder %s16, 0
    %p131 = por %p129, %p130
    %p132 = scmp.ne.s32.totalorder %s118, %s119
    %p133 = scmp.eq.s32.totalorder %s17, 1
    %p134 = por %p132, %p133
    %p136 = scmp.ne.s32.totalorder %s119, %s135
    %p137 = scmp.eq.s32.totalorder %s17, 0
    %p138 = por %p136, %p137
    %p139 = scmp.le.s32.totalorder 1, %s11
    %p140 = scmp.lt.s32.totalorder %s11, 3
    %p141 = pnand %p139, %p140
    %p142 = pneg %p141
    // Predicated region
    $region9: #{residual_block_pallas.4} parent=5 // pred_check
      _
    $region10: #{residual_block_pallas.4} parent=5 // pred_check_branch
      %144 = sbr.rel (%p141) target = $region12
    $region11: #{residual_block_pallas.4} parent=5 // pred_region
      %s145 = ssub.s32 %s11, 1
      // Predicated region
      $region13: #{residual_block_pallas.4} parent=11 // pred_check
        %p146 = pneg %p58
      $region14: #{residual_block_pallas.4} parent=11 // pred_check_branch
        %148 = sbr.rel (%p146) target = $region16
      $region15: #{residual_block_pallas.4} parent=11 // pred_region
        _
      $region16: #{residual_block_pallas.4} parent=11 // pred_fallthru
        _
      // Predicated region
      $region17: #{residual_block_pallas.4} parent=11 // pred_check
        %p149 = pneg %p79
      $region18: #{residual_block_pallas.4} parent=11 // pred_check_branch
        %151 = sbr.rel (%p149) target = $region20
      $region19: #{residual_block_pallas.4} parent=11 // pred_region
        _
      $region20: #{residual_block_pallas.4} parent=11 // pred_fallthru
        _
    $region12: #{residual_block_pallas.4} parent=5 // pred_fallthru
      _
    %p152 = scmp.lt.s32.totalorder %s11, 2
    // Predicated region
    $region21: #{residual_block_pallas.4} parent=5 // pred_check
      %p153 = pneg %p152
    $region22: #{residual_block_pallas.4} parent=5 // pred_check_branch
      %155 = sbr.rel (%p153) target = $region24
    $region23: #{residual_block_pallas.4} parent=5 // pred_region
      // Predicated region
      $region25: #{residual_block_pallas.4} parent=23 // pred_check
        %p156 = pneg %p31
      $region26: #{residual_block_pallas.4} parent=23 // pred_check_branch
        %158 = sbr.rel (%p156) target = $region28
      $region27: #{residual_block_pallas.4} parent=23 // pred_region
        %p159 = scmp.lt.s32.totalorder %s11, 1
        %s160 = scalar_select %p159, %s11, 1
        %s161 = smul.addr %s160, 3
        %s162 = smul.addr %s161, 8
        %s163 = scalar_lea.vmem %s0, %s162
      $region28: #{residual_block_pallas.4} parent=23 // pred_fallthru
        _
    $region24: #{residual_block_pallas.4} parent=5 // pred_fallthru
      _
    %p164 = scmp.le.s32.totalorder 1, %s11
    %p165 = scmp.lt.s32.totalorder %s11, 3
    %p166 = pnand %p164, %p165
    %p167 = pneg %p166
    // Predicated region
    $region29: #{residual_block_pallas.4} parent=5 // pred_check
      _
    $region30: #{residual_block_pallas.4} parent=5 // pred_check_branch
      %169 = sbr.rel (%p166) target = $region32
    $region31: #{residual_block_pallas.4} parent=5 // pred_region
      %s170 = ssub.s32 %s11, 1
      %p171 = scmp.lt.s32.totalorder %s16, 1
      %s172 = scalar_select %p171, %s16, 1
      %s173 = smul.addr %s172, 3
      %s174 = smul.addr %s173, 8
      %s175 = scalar_lea.vmem %s0, %s174
      %p176 = pneg %p37
      %p177 = pneg %p34
      %p178 = pneg %p58
      %p179 = pneg %p55
      %p180 = pneg %p79
      %p181 = pneg %p76
      %p182 = pneg %p105
      %p183 = pneg %p102
      %p184 = scmp.lt.s32.totalorder %s16, 1
      %s185 = scalar_select %p184, %s16, 1
      %s186 = smul.addr %s185, 3
      %s187 = smul.addr %s186, 8
      %s188 = scalar_lea.vmem %s3, %s187
      %p189 = pneg %p131
      %p190 = pneg %p128
      %p191 = scmp.lt.s32.totalorder %s16, 1
      %s192 = scalar_select %p191, %s16, 1
      %s193 = smul.addr %s192, 8
      %s194 = scalar_lea.vmem %s4, %s193
      %p195 = scmp.lt.s32.totalorder %s16, 1
      %s196 = scalar_select %p195, %s16, 1
      %s197 = smul.addr %s196, 3
      %s198 = smul.addr %s197, 8
      %s199 = scalar_lea.vmem %s0, %s198
      %p200 = scmp.lt.s32.totalorder %s16, 1
      %s201 = scalar_select %p200, %s16, 1
      %s202 = smul.addr %s201, 3
      %s203 = smul.addr %s202, 8
      %s204 = scalar_lea.vmem %s3, %s203
      %p205 = scmp.lt.s32.totalorder %s16, 1
      %s206 = scalar_select %p205, %s16, 1
      %s207 = smul.addr %s206, 8
      %s208 = scalar_lea.vmem %s4, %s207
      %v210 = vld [vmem:[%s199] sm:$0xff]
      %v211 = vld [vmem:[%s199 + $0x8] sm:$0xff]
      %v212 = vld [vmem:[%s199 + $0x10] sm:$0xff]
      %216 = vrot.lane.b32.xlu0 %v210, 127
      %v217 = vpop.permute.xlu0 %216
      %218 = vrot.lane.b32.xlu0 %v211, 127
      %v219 = vpop.permute.xlu0 %218
      %220 = vrot.lane.b32.xlu0 %v212, 127
      %v221 = vpop.permute.xlu0 %220
      %vm222 = vcmask 1039360
      %v223 = vsel %vm222, %v217, %v219
      %v224 = vsel %vm222, %v219, %v221
      %228 = vrot.lane.b32.xlu0 %v210, 126
      %v229 = vpop.permute.xlu0 %228
      %230 = vrot.lane.b32.xlu0 %v211, 126
      %v231 = vpop.permute.xlu0 %230
      %232 = vrot.lane.b32.xlu0 %v212, 126
      %v233 = vpop.permute.xlu0 %232
      %vm234 = vcmask 1031168
      %v235 = vsel %vm234, %v229, %v231
      %v236 = vsel %vm234, %v231, %v233
      %240 = vrot.lane.b32.xlu0 %v210, 110
      %v241 = vpop.permute.xlu0 %240
      %242 = vrot.lane.b32.xlu0 %v211, 110
      %v243 = vpop.permute.xlu0 %242
      %244 = vrot.lane.b32.xlu0 %v212, 110
      %v245 = vpop.permute.xlu0 %244
      %vm246 = vcmask 900096
      %v247 = vsel %vm246, %v241, %v243
      %v248 = vsel %vm246, %v243, %v245
      %252 = vrot.lane.b32.xlu0 %v210, 109
      %v253 = vpop.permute.xlu0 %252
      %254 = vrot.lane.b32.xlu0 %v211, 109
      %v255 = vpop.permute.xlu0 %254
      %256 = vrot.lane.b32.xlu0 %v212, 109
      %v257 = vpop.permute.xlu0 %256
      %vm258 = vcmask 891904
      %v259 = vsel %vm258, %v253, %v255
      %v260 = vsel %vm258, %v255, %v257
      %264 = vrot.lane.b32.xlu0 %v210, 108
      %v265 = vpop.permute.xlu0 %264
      %266 = vrot.lane.b32.xlu0 %v211, 108
      %v267 = vpop.permute.xlu0 %266
      %268 = vrot.lane.b32.xlu0 %v212, 108
      %v269 = vpop.permute.xlu0 %268
      %vm270 = vcmask 883712
      %v271 = vsel %vm270, %v265, %v267
      %v272 = vsel %vm270, %v267, %v269
      %276 = vrot.lane.b32.xlu0 %v210, 92
      %v277 = vpop.permute.xlu0 %276
      %278 = vrot.lane.b32.xlu0 %v211, 92
      %v279 = vpop.permute.xlu0 %278
      %280 = vrot.lane.b32.xlu0 %v212, 92
      %v281 = vpop.permute.xlu0 %280
      %vm282 = vcmask 752640
      %v283 = vsel %vm282, %v277, %v279
      %v284 = vsel %vm282, %v279, %v281
      %288 = vrot.lane.b32.xlu0 %v210, 91
      %v289 = vpop.permute.xlu0 %288
      %290 = vrot.lane.b32.xlu0 %v211, 91
      %v291 = vpop.permute.xlu0 %290
      %292 = vrot.lane.b32.xlu0 %v212, 91
      %v293 = vpop.permute.xlu0 %292
      %vm294 = vcmask 744448
      %v295 = vsel %vm294, %v289, %v291
      %v296 = vsel %vm294, %v291, %v293
      %300 = vrot.lane.b32.xlu0 %v210, 90
      %v301 = vpop.permute.xlu0 %300
      %302 = vrot.lane.b32.xlu0 %v211, 90
      %v303 = vpop.permute.xlu0 %302
      %304 = vrot.lane.b32.xlu0 %v212, 90
      %v305 = vpop.permute.xlu0 %304
      %vm306 = vcmask 736256
      %v307 = vsel %vm306, %v301, %v303
      %v308 = vsel %vm306, %v303, %v305
      %v312 = vpack.c.bf16 %v223, %v210
      %v313 = vpack.c.bf16 %v224, %v211
      %v314 = vpack.c.bf16 %v221, %v212
      %v315 = vpack.c.bf16 %v247, %v235
      %v316 = vpack.c.bf16 %v248, %v236
      %v317 = vpack.c.bf16 %v245, %v233
      %v318 = vpack.c.bf16 %v271, %v259
      %v319 = vpack.c.bf16 %v272, %v260
      %v320 = vpack.c.bf16 %v269, %v257
      %v321 = vpack.c.bf16 %v295, %v283
      %v322 = vpack.c.bf16 %v296, %v284
      %v323 = vpack.c.bf16 %v293, %v281
      %v324 = vpack.c.bf16 %v307, %v307
      %v325 = vpack.c.bf16 %v308, %v308
      %v326 = vpack.c.bf16 %v305, %v305
      %v327 = vld [vmem:[%s1] sm:$0xf]
      %vm328 = vcmask 588800
      %v330 = vsel %vm328, %v327, 0
      %vm332 = vcmask 1043456
      %v334 = vsel %vm332, %v324, 0
      %v337 = vsel %vm332, %v325, 0
      %v340 = vsel %vm332, %v326, 0
      %342 = vmatprep.subr.bf16.mxu0 %v313
      %343 = vmatpush1.bf16.msra.mxu0 %v312
      %344 = vmatprep.subr.bf16.mxu0 %v316
      %345 = vmatpush1.bf16.msra.mxu0 %v315
      %346 = vmatprep.subr.bf16.mxu0 %v319
      %347 = vmatpush1.bf16.msra.mxu0 %v318
      %348 = vmatprep.subr.bf16.mxu0 %v322
      %349 = vmatpush1.bf16.msra.mxu0 %v321
      %350 = vmatprep.subr.bf16.mxu0 %v337
      %351 = vmatpush1.bf16.msra.mxu0 %v334
      %352 = vmatprep.subr.bf16.mxu0 0
      %353 = vmatpush1.bf16.msra.mxu0 0
      %354 = vmatprep.subr.bf16.mxu0 0
      %355 = vmatpush1.bf16.msra.mxu0 0
      %356 = vmatprep.subr.bf16.mxu0 0
      %357 = vmatpush1.bf16.msra.mxu0 0
      %358 = vmatprep.subr.bf16.mxu0 0
      %359 = vmatpush1.bf16.msra.mxu0 0
      %360 = vmatprep.subr.bf16.mxu0 0
      %361 = vmatpush1.bf16.msra.mxu0 0
      %362 = vmatprep.subr.bf16.mxu0 0
      %363 = vmatpush1.bf16.msra.mxu0 0
      %364 = vmatprep.subr.bf16.mxu0 0
      %365 = vmatpush1.bf16.msra.mxu0 0
      %366 = vmatprep.subr.bf16.mxu0 0
      %367 = vmatpush1.bf16.msra.mxu0 0
      %368 = vmatprep.subr.bf16.mxu0 0
      %369 = vmatpush1.bf16.msra.mxu0 0
      %370 = vmatprep.subr.bf16.mxu0 0
      %371 = vmatpush1.bf16.msra.mxu0 0
      %372 = vmatprep.subr.bf16.mxu0 0
      %373 = vmatpush1.bf16.msra.mxu0 0
      %374 = vmatprep.mubr.bf16.mxu0 0
      %375 = vmatmul.mubr.bf16.gmra.mrb[0].mxu0 %v330
      %v376 = vpop.f32.mrb[0].mxu0
      %v377 = vadd.f32 0.0, %v376
      %v378 = vpop.f32.mrb[0].mxu0
      %v379 = vadd.f32 0.0, %v378
      %v380 = vpop.f32.mrb[0].mxu0
      %v381 = vpop.f32.mrb[0].mxu0
      %382 = vdwg.mxu0
      %383 = vmatprep.subr.bf16.mxu0 0
      %384 = vmatpush1.bf16.msra.mxu0 %v314
      %385 = vmatprep.subr.bf16.mxu0 0
      %386 = vmatpush1.bf16.msra.mxu0 %v317
      %387 = vmatprep.subr.bf16.mxu0 0
      %388 = vmatpush1.bf16.msra.mxu0 %v320
      %389 = vmatprep.subr.bf16.mxu0 0
      %390 = vmatpush1.bf16.msra.mxu0 %v323
      %391 = vmatprep.subr.bf16.mxu0 0
      %392 = vmatpush1.bf16.msra.mxu0 %v340
      %393 = vmatprep.subr.bf16.mxu0 0
      %394 = vmatpush1.bf16.msra.mxu0 0
      %395 = vmatprep.subr.bf16.mxu0 0
      %396 = vmatpush1.bf16.msra.mxu0 0
      %397 = vmatprep.subr.bf16.mxu0 0
      %398 = vmatpush1.bf16.msra.mxu0 0
      %399 = vmatprep.subr.bf16.mxu0 0
      %400 = vmatpush1.bf16.msra.mxu0 0
      %401 = vmatprep.subr.bf16.mxu0 0
      %402 = vmatpush1.bf16.msra.mxu0 0
      %403 = vmatprep.subr.bf16.mxu0 0
      %404 = vmatpush1.bf16.msra.mxu0 0
      %405 = vmatprep.subr.bf16.mxu0 0
      %406 = vmatpush1.bf16.msra.mxu0 0
      %407 = vmatprep.subr.bf16.mxu0 0
      %408 = vmatpush1.bf16.msra.mxu0 0
      %409 = vmatprep.subr.bf16.mxu0 0
      %410 = vmatpush1.bf16.msra.mxu0 0
      %411 = vmatprep.subr.bf16.mxu0 0
      %412 = vmatpush1.bf16.msra.mxu0 0
      %413 = vmatprep.subr.bf16.mxu0 0
      %414 = vmatpush1.bf16.msra.mxu0 0
      %415 = vmatprep.mubr.bf16.mxu0 0
      %416 = vmatmul.mubr.bf16.gmra.mrb[0].mxu0 %v330
      %v417 = vpop.f32.mrb[0].mxu0
      %v418 = vadd.f32 0.0, %v417
      %v419 = vpop.f32.mrb[0].mxu0
      %v420 = vpop.f32.mrb[0].mxu0
      %v421 = vpop.f32.mrb[0].mxu0
      %422 = vdwg.mxu0
      %423 = vst [vmem:[%s204] sm:$0xff] %v377
      %424 = vst [vmem:[%s204 + $0x8] sm:$0xff] %v379
      %vm425 = vcmask 244736
      %426 = vst.msk [vmem:[%s204 + $0x10] sm:$0xff] %vm425, %v418
      %v427 = vld [vmem:[%s2] sm:$0x7]
      %v429 = vlaneseq
      %v430 = vshrl.u32 %v429, 7
      %v431 = vsub.s32 0, %v430
      %v432 = vrot.slane %v427, %v431
      %v433 = vlaneseq
      %v434 = vshrl.u32 %v433, 7
      %v435 = vsub.s32 1, %v434
      %v436 = vrot.slane %v427, %v435
      %v437 = vlaneseq
      %v438 = vshrl.u32 %v437, 7
      %v439 = vsub.s32 2, %v438
      %v440 = vrot.slane %v427, %v439
      %v444 = vmul.f32 %v377, %v432
      %v445 = vmul.f32 %v379, %v436
      %v446 = vmul.f32 %v418, %v440
      %v447 = vadd.f32 %v444, %v445
      %v448 = vsel %vm425, %v446, 0.0
      %v449 = vadd.f32 %v447, %v448
      %450 = vadd.xlane.f32.xlu0 %v449
      %v451 = vpop.xlane.xlu0 %450
      %v452 = vmul.f32 %v444, %v377
      %v453 = vmul.f32 %v445, %v379
      %v454 = vmul.f32 %v446, %v418
      %v455 = vadd.f32 %v452, %v453
      %v456 = vsel %vm425, %v454, 0.0
      %v457 = vadd.f32 %v455, %v456
      %458 = vadd.xlane.f32.xlu0 %v457
      %v459 = vpop.xlane.xlu0 %458
      %vm460 = vcmask 7168
      %v461 = vsel %vm460, %v451, %v459
      %vm462 = vcmask 15360
      %463 = vst.msk [vmem:[%s208] sm:$0xff] %vm462, %v461
      %p464 = scmp.lt.s32.totalorder %s16, 1
      %s465 = scalar_select %p464, %s16, 1
      %s466 = smul.addr %s465, 3
      %s467 = smul.addr %s466, 8
      %s468 = scalar_lea.vmem %s3, %s467
      %p469 = scmp.lt.s32.totalorder %s16, 1
      %s470 = scalar_select %p469, %s16, 1
      %s471 = smul.addr %s470, 8
      %s472 = scalar_lea.vmem %s4, %s471
      // Predicated region
      $region33: #{residual_block_pallas.4} parent=31 // pred_check
        %p473 = pneg %p102
      $region34: #{residual_block_pallas.4} parent=31 // pred_check_branch
        %475 = sbr.rel (%p473) target = $region36
      $region35: #{residual_block_pallas.4} parent=31 // pred_region
        _
      $region36: #{residual_block_pallas.4} parent=31 // pred_fallthru
        _
      // Predicated region
      $region37: #{residual_block_pallas.4} parent=31 // pred_check
        %p476 = pneg %p128
      $region38: #{residual_block_pallas.4} parent=31 // pred_check_branch
        %478 = sbr.rel (%p476) target = $region40
      $region39: #{residual_block_pallas.4} parent=31 // pred_region
        _
      $region40: #{residual_block_pallas.4} parent=31 // pred_fallthru
        _
    $region32: #{residual_block_pallas.4} parent=5 // pred_fallthru
      _
    %p479 = scmp.le.s32.totalorder 2, %s11
    // Predicated region
    $region41: #{residual_block_pallas.4} parent=5 // pred_check
      %p480 = pneg %p479
    $region42: #{residual_block_pallas.4} parent=5 // pred_check_branch
      %482 = sbr.rel (%p480) target = $region44
    $region43: #{residual_block_pallas.4} parent=5 // pred_region
      %s483 = ssub.s32 %s11, 2
      // Predicated region
      $region45: #{residual_block_pallas.4} parent=43 // pred_check
        %p484 = pneg %p108
      $region46: #{residual_block_pallas.4} parent=43 // pred_check_branch
        %486 = sbr.rel (%p484) target = $region48
      $region47: #{residual_block_pallas.4} parent=43 // pred_region
        %p487 = scmp.lt.s32.totalorder %s17, 1
        %s488 = scalar_select %p487, %s17, 1
        %s489 = smul.addr %s488, 3
        %s490 = smul.addr %s489, 8
        %s491 = scalar_lea.vmem %s3, %s490
      $region48: #{residual_block_pallas.4} parent=43 // pred_fallthru
        _
      // Predicated region
      $region49: #{residual_block_pallas.4} parent=43 // pred_check
        %p492 = pneg %p134
      $region50: #{residual_block_pallas.4} parent=43 // pred_check_branch
        %494 = sbr.rel (%p492) target = $region52
      $region51: #{residual_block_pallas.4} parent=43 // pred_region
        %p495 = scmp.lt.s32.totalorder %s17, 1
        %s496 = scalar_select %p495, %s17, 1
        %s497 = smul.addr %s496, 8
        %s498 = scalar_lea.vmem %s4, %s497
      $region52: #{residual_block_pallas.4} parent=43 // pred_fallthru
        _
    $region44: #{residual_block_pallas.4} parent=5 // pred_fallthru
      _
  $region6: #{residual_block_pallas.4} parent=0 // loop_footer
    %s15 = sadd.s32 1, %s11
  $region7: #{residual_block_pallas.4} parent=0 // loop_footer_branch
    %10 = sbr.rel target = $region3
  $region8: #{residual_block_pallas.4} parent=0 // loop_exit
    _

// kernel: residual_block_pallas.5
$region0: #{residual_block_pallas.5}
  #allocation0 [shape = 'u32[]', space=smem, size = 0x4, offset = 0x4, fixed_abs, tag = 'smem constant byte address 0x4 - core index']
  #allocation1 [shape = 'u32[144,128]{1,0:T(1,128)}', space=vmem, size = 0x12000, scoped, tag = 'internal scratch']
  %s0 = inlined_call_operand.vmem [shape: f32[2,8,286], index: 0, kind: input, shape index: {}]
  %s1 = inlined_call_operand.vmem [shape: f32[8,1], index: 1, kind: input, shape index: {}]
  %s2 = inlined_call_operand.vmem [shape: f32[2,8,1], index: 2, kind: input, shape index: {}]
  %s3 = inlined_call_operand.vmem [shape: f32[1,286], index: 3, kind: input, shape index: {}]
  %s4 = inlined_call_operand.vmem [shape: f32[2,8,324], index: 4, kind: output, shape index: {}]
  %s5 = sld [smem:[#allocation0]]
  $region49: #{residual_block_pallas.5} parent=0
    _
  %s7 = ssub.s32 1, %s5
  %s8 = scalar_select 0, %s7, %s5
  loop: start=0, step=1, limit=4
  $region2: #{residual_block_pallas.5} parent=0 // loop_pre_header
    _
  $region3: #{residual_block_pallas.5} parent=0 // loop_header
    %s10 = sphi 0, %s14
    %p11 = scmp.ge.s32.totalorder %s10, 4
    %s20 = sphi 0, %s22
    %s23 = sphi 0, %s20
    %s24 = sphi 0, %s23
    %s40 = sphi 0, %s24
    %s44 = sphi 0, %s44
    %s46 = sphi 0, %s44
    %s47 = sphi 0, %s46
    %s61 = sphi 0, %s47
    %s67 = sphi 0, %s69
    %s70 = sphi 0, %s67
    %s71 = sphi 0, %s70
    %s87 = sphi 0, %s71
    %s91 = sphi 0, %s91
    %s93 = sphi 0, %s91
    %s94 = sphi 0, %s93
    %s108 = sphi 0, %s94
    %s114 = sphi 0, %s116
    %s117 = sphi 0, %s114
    %s118 = sphi 0, %s117
    %s134 = sphi 0, %s118
  $region4: #{residual_block_pallas.5} parent=0 // loop_header_branch
    %13 = sbr.rel (%p11) target = $region8
  $region5: #{residual_block_pallas.5} parent=0 // loop_body
    %s15 = ssub.s32 %s10, 1
    %s16 = ssub.s32 %s10, 2
    %s17 = sadd.s32 %s10, 1
    %s18 = ssub.s32 %s10, %s17
    %p19 = scmp.eq.s32.totalorder %s18, 0
    %s21 = sadd.s32 %s20, 1
    %s22 = scalar_select %p19, %s20, %s21
    %p25 = pneg %p19
    %p26 = scmp.eq.s32.totalorder %s10, 1
    %p27 = por %p25, %p26
    %p28 = scmp.ne.s32.totalorder %s20, %s23
    %p29 = scmp.eq.s32.totalorder %s10, 0
    %p30 = por %p28, %p29
    %p31 = scmp.ne.s32.totalorder %s20, %s23
    %p32 = scmp.eq.s32.totalorder %s15, 1
    %p33 = por %p31, %p32
    %p34 = scmp.ne.s32.totalorder %s23, %s24
    %p35 = scmp.eq.s32.totalorder %s15, 0
    %p36 = por %p34, %p35
    %p37 = scmp.ne.s32.totalorder %s23, %s24
    %p38 = scmp.eq.s32.totalorder %s16, 1
    %p39 = por %p37, %p38
    %p41 = scmp.ne.s32.totalorder %s24, %s40
    %p42 = scmp.eq.s32.totalorder %s16, 0
    %p43 = por %p41, %p42
    %s45 = sadd.s32 %s44, 1
    %p48 = scmp.eq.s32.totalorder %s10, 1
    %p49 = scmp.ne.s32.totalorder %s44, %s46
    %p50 = scmp.eq.s32.totalorder %s10, 0
    %p51 = por %p49, %p50
    %p52 = scmp.ne.s32.totalorder %s44, %s46
    %p53 = scmp.eq.s32.totalorder %s15, 1
    %p54 = por %p52, %p53
    %p55 = scmp.ne.s32.totalorder %s46, %s47
    %p56 = scmp.eq.s32.totalorder %s15, 0
    %p57 = por %p55, %p56
    %p58 = scmp.ne.s32.totalorder %s46, %s47
    %p59 = scmp.eq.s32.totalorder %s16, 1
    %p60 = por %p58, %p59
    %p62 = scmp.ne.s32.totalorder %s47, %s61
    %p63 = scmp.eq.s32.totalorder %s16, 0
    %p64 = por %p62, %p63
    %s65 = ssub.s32 %s10, %s17
    %p66 = scmp.eq.s32.totalorder %s65, 0
    %s68 = sadd.s32 %s67, 1
    %s69 = scalar_select %p66, %s67, %s68
    %p72 = pneg %p66
    %p73 = scmp.eq.s32.totalorder %s10, 1
    %p74 = por %p72, %p73
    %p75 = scmp.ne.s32.totalorder %s67, %s70
    %p76 = scmp.eq.s32.totalorder %s10, 0
    %p77 = por %p75, %p76
    %p78 = scmp.ne.s32.totalorder %s67, %s70
    %p79 = scmp.eq.s32.totalorder %s15, 1
    %p80 = por %p78, %p79
    %p81 = scmp.ne.s32.totalorder %s70, %s71
    %p82 = scmp.eq.s32.totalorder %s15, 0
    %p83 = por %p81, %p82
    %p84 = scmp.ne.s32.totalorder %s70, %s71
    %p85 = scmp.eq.s32.totalorder %s16, 1
    %p86 = por %p84, %p85
    %p88 = scmp.ne.s32.totalorder %s71, %s87
    %p89 = scmp.eq.s32.totalorder %s16, 0
    %p90 = por %p88, %p89
    %s92 = sadd.s32 %s91, 1
    %p95 = scmp.eq.s32.totalorder %s10, 1
    %p96 = scmp.ne.s32.totalorder %s91, %s93
    %p97 = scmp.eq.s32.totalorder %s10, 0
    %p98 = por %p96, %p97
    %p99 = scmp.ne.s32.totalorder %s91, %s93
    %p100 = scmp.eq.s32.totalorder %s15, 1
    %p101 = por %p99, %p100
    %p102 = scmp.ne.s32.totalorder %s93, %s94
    %p103 = scmp.eq.s32.totalorder %s15, 0
    %p104 = por %p102, %p103
    %p105 = scmp.ne.s32.totalorder %s93, %s94
    %p106 = scmp.eq.s32.totalorder %s16, 1
    %p107 = por %p105, %p106
    %p109 = scmp.ne.s32.totalorder %s94, %s108
    %p110 = scmp.eq.s32.totalorder %s16, 0
    %p111 = por %p109, %p110
    %s112 = ssub.s32 %s10, %s17
    %p113 = scmp.eq.s32.totalorder %s112, 0
    %s115 = sadd.s32 %s114, 1
    %s116 = scalar_select %p113, %s114, %s115
    %p119 = pneg %p113
    %p120 = scmp.eq.s32.totalorder %s10, 1
    %p121 = por %p119, %p120
    %p122 = scmp.ne.s32.totalorder %s114, %s117
    %p123 = scmp.eq.s32.totalorder %s10, 0
    %p124 = por %p122, %p123
    %p125 = scmp.ne.s32.totalorder %s114, %s117
    %p126 = scmp.eq.s32.totalorder %s15, 1
    %p127 = por %p125, %p126
    %p128 = scmp.ne.s32.totalorder %s117, %s118
    %p129 = scmp.eq.s32.totalorder %s15, 0
    %p130 = por %p128, %p129
    %p131 = scmp.ne.s32.totalorder %s117, %s118
    %p132 = scmp.eq.s32.totalorder %s16, 1
    %p133 = por %p131, %p132
    %p135 = scmp.ne.s32.totalorder %s118, %s134
    %p136 = scmp.eq.s32.totalorder %s16, 0
    %p137 = por %p135, %p136
    %p138 = scmp.le.s32.totalorder 1, %s10
    %p139 = scmp.lt.s32.totalorder %s10, 3
    %p140 = pnand %p138, %p139
    %p141 = pneg %p140
    // Predicated region
    $region9: #{residual_block_pallas.5} parent=5 // pred_check
      _
    $region10: #{residual_block_pallas.5} parent=5 // pred_check_branch
      %143 = sbr.rel (%p140) target = $region12
    $region11: #{residual_block_pallas.5} parent=5 // pred_region
      %s144 = ssub.s32 %s10, 1
      // Predicated region
      $region13: #{residual_block_pallas.5} parent=11 // pred_check
        %p145 = pneg %p57
      $region14: #{residual_block_pallas.5} parent=11 // pred_check_branch
        %147 = sbr.rel (%p145) target = $region16
      $region15: #{residual_block_pallas.5} parent=11 // pred_region
        _
      $region16: #{residual_block_pallas.5} parent=11 // pred_fallthru
        _
      // Predicated region
      $region17: #{residual_block_pallas.5} parent=11 // pred_check
        %p148 = pneg %p104
      $region18: #{residual_block_pallas.5} parent=11 // pred_check_branch
        %150 = sbr.rel (%p148) target = $region20
      $region19: #{residual_block_pallas.5} parent=11 // pred_region
        _
      $region20: #{residual_block_pallas.5} parent=11 // pred_fallthru
        _
    $region12: #{residual_block_pallas.5} parent=5 // pred_fallthru
      _
    %p151 = scmp.lt.s32.totalorder %s10, 2
    // Predicated region
    $region21: #{residual_block_pallas.5} parent=5 // pred_check
      %p152 = pneg %p151
    $region22: #{residual_block_pallas.5} parent=5 // pred_check_branch
      %154 = sbr.rel (%p152) target = $region24
    $region23: #{residual_block_pallas.5} parent=5 // pred_region
      // Predicated region
      $region25: #{residual_block_pallas.5} parent=23 // pred_check
        %p155 = pneg %p30
      $region26: #{residual_block_pallas.5} parent=23 // pred_check_branch
        %157 = sbr.rel (%p155) target = $region28
      $region27: #{residual_block_pallas.5} parent=23 // pred_region
        %p158 = scmp.lt.s32.totalorder %s10, 1
        %s159 = scalar_select %p158, %s10, 1
        %s160 = smul.addr %s159, 3
        %s161 = smul.addr %s160, 8
        %s162 = scalar_lea.vmem %s0, %s161
      $region28: #{residual_block_pallas.5} parent=23 // pred_fallthru
        _
      // Predicated region
      $region29: #{residual_block_pallas.5} parent=23 // pred_check
        %p163 = pneg %p77
      $region30: #{residual_block_pallas.5} parent=23 // pred_check_branch
        %165 = sbr.rel (%p163) target = $region32
      $region31: #{residual_block_pallas.5} parent=23 // pred_region
        %p166 = scmp.lt.s32.totalorder %s10, 1
        %s167 = scalar_select %p166, %s10, 1
        %s168 = smul.addr %s167, 8
        %s169 = scalar_lea.vmem %s2, %s168
      $region32: #{residual_block_pallas.5} parent=23 // pred_fallthru
        _
    $region24: #{residual_block_pallas.5} parent=5 // pred_fallthru
      _
    %p170 = scmp.le.s32.totalorder 1, %s10
    %p171 = scmp.lt.s32.totalorder %s10, 3
    %p172 = pnand %p170, %p171
    %p173 = pneg %p172
    // Predicated region
    $region33: #{residual_block_pallas.5} parent=5 // pred_check
      _
    $region34: #{residual_block_pallas.5} parent=5 // pred_check_branch
      %175 = sbr.rel (%p172) target = $region36
    $region35: #{residual_block_pallas.5} parent=5 // pred_region
      %s176 = ssub.s32 %s10, 1
      %p177 = scmp.lt.s32.totalorder %s15, 1
      %s178 = scalar_select %p177, %s15, 1
      %s179 = smul.addr %s178, 3
      %s180 = smul.addr %s179, 8
      %s181 = scalar_lea.vmem %s0, %s180
      %p182 = pneg %p36
      %p183 = pneg %p33
      %p184 = pneg %p57
      %p185 = pneg %p54
      %p186 = scmp.lt.s32.totalorder %s15, 1
      %s187 = scalar_select %p186, %s15, 1
      %s188 = smul.addr %s187, 8
      %s189 = scalar_lea.vmem %s2, %s188
      %p190 = pneg %p83
      %p191 = pneg %p80
      %p192 = pneg %p104
      %p193 = pneg %p101
      %p194 = pneg %p130
      %p195 = pneg %p127
      %p196 = scmp.lt.s32.totalorder %s15, 1
      %s197 = scalar_select %p196, %s15, 1
      %s198 = smul.addr %s197, 3
      %s199 = smul.addr %s198, 8
      %s200 = scalar_lea.vmem %s4, %s199
      %p201 = scmp.lt.s32.totalorder %s15, 1
      %s202 = scalar_select %p201, %s15, 1
      %s203 = smul.addr %s202, 3
      %s204 = smul.addr %s203, 8
      %s205 = scalar_lea.vmem %s0, %s204
      %p206 = scmp.lt.s32.totalorder %s15, 1
      %s207 = scalar_select %p206, %s15, 1
      %s208 = smul.addr %s207, 8
      %s209 = scalar_lea.vmem %s2, %s208
      %p210 = scmp.lt.s32.totalorder %s15, 1
      %s211 = scalar_select %p210, %s15, 1
      %s212 = smul.addr %s211, 3
      %s213 = smul.addr %s212, 8
      %s214 = scalar_lea.vmem %s4, %s213
      %v215 = vld [vmem:[%s205] sm:$0xff]
      %v216 = vld [vmem:[%s205 + $0x8] sm:$0xff]
      %v217 = vld [vmem:[%s205 + $0x10] sm:$0xff]
      %v218 = vld [vmem:[%s1] sm:$0xff]
      %220 = vset.pattern.permute.xlu0 0
      %221 = vperm.xlu0 %220, %v218
      %v222 = vpop.permute.xlu0 %221
      %v224 = vmul.f32 %v222, %v215
      %v225 = vmul.f32 %v222, %v216
      %v226 = vmul.f32 %v222, %v217
      %v227 = vld [vmem:[%s209] sm:$0xff]
      %229 = vset.pattern.permute.xlu0 0
      %230 = vperm.xlu0 %229, %v227
      %v231 = vpop.permute.xlu0 %230
      %v233 = vadd.f32 %v224, %v231
      %v234 = vadd.f32 %v225, %v231
      %v235 = vadd.f32 %v226, %v231
      %v236 = vmax.f32 %v233, 0.0
      %v237 = vmax.f32 %v234, 0.0
      %v238 = vmax.f32 %v235, 0.0
      %v239 = vld [vmem:[%s3] sm:$0x7]
      %v241 = vlaneseq
      %v242 = vshrl.u32 %v241, 7
      %v243 = vsub.s32 0, %v242
      %v244 = vrot.slane %v239, %v243
      %v245 = vlaneseq
      %v246 = vshrl.u32 %v245, 7
      %v247 = vsub.s32 1, %v246
      %v248 = vrot.slane %v239, %v247
      %v249 = vlaneseq
      %v250 = vshrl.u32 %v249, 7
      %v251 = vsub.s32 2, %v250
      %v252 = vrot.slane %v239, %v251
      %v256 = vmul.f32 %v236, %v244
      %v257 = vmul.f32 %v237, %v248
      %v258 = vmul.f32 %v238, %v252
      %259 = vst [vmem:[%s214] sm:$0xff] 0.0
      %260 = vst [vmem:[%s214 + $0x8] sm:$0xff] 0.0
      %vm261 = vcmask 556032
      %262 = vst.msk [vmem:[%s214 + $0x10] sm:$0xff] %vm261, 0.0
      %266 = vrot.lane.b32.xlu0 %v256, 19
      %v267 = vpop.permute.xlu0 %266
      %268 = vrot.lane.b32.xlu0 %v257, 19
      %v269 = vpop.permute.xlu0 %268
      %270 = vrot.lane.b32.xlu0 %v258, 19
      %v271 = vpop.permute.xlu0 %270
      %vm272 = vcmask 154624
      %v273 = vsel %vm272, %v267, %v269
      %v274 = vsel %vm272, %v269, %v271
      %vm278 = vcmask 1047704
      %279 = vst.msk [vmem:[%s214] sm:$0xff] %vm278, %v267
      %280 = vst [vmem:[%s214 + $0x8] sm:$0xff] %v273
      %vm281 = vcmask 400384
      %282 = vst.msk [vmem:[%s214 + $0x10] sm:$0xff] %vm281, %v274
      %p283 = scmp.lt.s32.totalorder %s15, 1
      %s284 = scalar_select %p283, %s15, 1
      %s285 = smul.addr %s284, 3
      %s286 = smul.addr %s285, 8
      %s287 = scalar_lea.vmem %s4, %s286
      // Predicated region
      $region37: #{residual_block_pallas.5} parent=35 // pred_check
        %p288 = pneg %p127
      $region38: #{residual_block_pallas.5} parent=35 // pred_check_branch
        %290 = sbr.rel (%p288) target = $region40
      $region39: #{residual_block_pallas.5} parent=35 // pred_region
        _
      $region40: #{residual_block_pallas.5} parent=35 // pred_fallthru
        _
    $region36: #{residual_block_pallas.5} parent=5 // pred_fallthru
      _
    %p291 = scmp.le.s32.totalorder 2, %s10
    // Predicated region
    $region41: #{residual_block_pallas.5} parent=5 // pred_check
      %p292 = pneg %p291
    $region42: #{residual_block_pallas.5} parent=5 // pred_check_branch
      %294 = sbr.rel (%p292) target = $region44
    $region43: #{residual_block_pallas.5} parent=5 // pred_region
      %s295 = ssub.s32 %s10, 2
      // Predicated region
      $region45: #{residual_block_pallas.5} parent=43 // pred_check
        %p296 = pneg %p133
      $region46: #{residual_block_pallas.5} parent=43 // pred_check_branch
        %298 = sbr.rel (%p296) target = $region48
      $region47: #{residual_block_pallas.5} parent=43 // pred_region
        %p299 = scmp.lt.s32.totalorder %s16, 1
        %s300 = scalar_select %p299, %s16, 1
        %s301 = smul.addr %s300, 3
        %s302 = smul.addr %s301, 8
        %s303 = scalar_lea.vmem %s4, %s302
      $region48: #{residual_block_pallas.5} parent=43 // pred_fallthru
        _
    $region44: #{residual_block_pallas.5} parent=5 // pred_fallthru
      _
  $region6: #{residual_block_pallas.5} parent=0 // loop_footer
    %s14 = sadd.s32 1, %s10
  $region7: #{residual_block_pallas.5} parent=0 // loop_footer_branch
    %9 = sbr.rel target = $region3
  $region8: #{residual_block_pallas.5} parent=0 // loop_exit
    _

</llo_original>
